<compile_context>
chip_gen: v6e
topology: v6e:2x2x1
jax: 0.10.0
libtpu: 0.0.40
codegen_flags: <defaults>
</compile_context>

<pallas_src>
import jax
import jax.numpy as jnp
from jax.experimental import pallas as pl
from jax.experimental.pallas import tpu as pltpu

IN_DIM = 6
HIDDEN = (64, 32)
OUT_DIM = 8

_TILE_B_MAX = 4096        # batch tile (sublane axis); multiple of 128
_MIN_PALLAS_BATCH = 1024  # below this, plain jnp (XLA fusion) is faster


def _cdiv(a, b):
    return -(-a // b)


def _round_up(n, m):
    return _cdiv(n, m) * m


# ----------------------------------------------------------------------------
# Kernels.  Batch lives on the sublane (second-to-last) axis:
#   x_ref: (TILE_B, IN_DIM), weights (in, out), biases (1, out),
#   o_ref: (TILE_B, OUT_DIM).  All per-tile HBM transfers are contiguous.
# ----------------------------------------------------------------------------
def _mlp_kernel_nomask(x_ref, w0_ref, b0_ref, w1_ref, b1_ref, w2_ref, b2_ref,
                       o_ref):
    h = jnp.dot(x_ref[...], w0_ref[...],
                preferred_element_type=jnp.float32) + b0_ref[...]
    h = jnp.maximum(h, 0.0)                                       # (TB, 64)
    h = jnp.dot(h, w1_ref[...],
                preferred_element_type=jnp.float32) + b1_ref[...]
    h = jnp.maximum(h, 0.0)                                       # (TB, 32)
    y = jnp.dot(h, w2_ref[...],
                preferred_element_type=jnp.float32) + b2_ref[...]
    o_ref[...] = jnp.clip(y, 0.0, 10.0).astype(o_ref.dtype)       # (TB, 8)


def _mlp_kernel_mask(x_ref, w0_ref, b0_ref, w1_ref, b1_ref, w2_ref, b2_ref,
                     mask_ref, o_ref):
    h = jnp.dot(x_ref[...], w0_ref[...],
                preferred_element_type=jnp.float32) + b0_ref[...]
    h = jnp.maximum(h, 0.0)
    h = jnp.dot(h, w1_ref[...],
                preferred_element_type=jnp.float32) + b1_ref[...]
    h = jnp.maximum(h, 0.0)
    y = jnp.dot(h, w2_ref[...],
                preferred_element_type=jnp.float32) + b2_ref[...]
    y = jnp.clip(y, 0.0, 10.0)
    # Multiply (not select) to preserve exact `y * mask` semantics for
    # arbitrary (not necessarily 0/1) masks.  Cast happens in-kernel (free VPU
    # slot); no wrapper-side float32 cast pass over the mask.
    o_ref[...] = (y * mask_ref[...].astype(jnp.float32)).astype(o_ref.dtype)


# ----------------------------------------------------------------------------
# Parameters (PyTorch nn.Linear layout: W (out, in), b (out,))
# ----------------------------------------------------------------------------
def init_params(key):
    dims = [IN_DIM] + list(HIDDEN) + [OUT_DIM]
    params = []
    for i in range(len(dims) - 1):
        fan_in, fan_out = dims[i], dims[i + 1]
        key, kw, kb = jax.random.split(key, 3)
        bound = 1.0 / (fan_in ** 0.5)
        w = jax.random.uniform(kw, (fan_out, fan_in), jnp.float32, -bound, bound)
        b = jax.random.uniform(kb, (fan_out,), jnp.float32, -bound, bound)
        params.append((w, b))
    return params


# ----------------------------------------------------------------------------
# Pure-JAX forward (reference + small-batch fast path)
# ----------------------------------------------------------------------------
def _forward_jnp(x, params, mask=None):
    (w0, b0), (w1, b1), (w2, b2) = params
    h = jnp.maximum(x @ w0.T + b0, 0.0)
    h = jnp.maximum(h @ w1.T + b1, 0.0)
    y = jnp.clip(h @ w2.T + b2, 0.0, 10.0)
    if mask is not None:
        y = y * mask.astype(y.dtype)
    return y


# ----------------------------------------------------------------------------
# Pallas forward
# ----------------------------------------------------------------------------
def _forward_pallas(x, params, mask=None):
    B = x.shape[0]
    assert x.shape[1] == IN_DIM
    (w0, b0), (w1, b1), (w2, b2) = params

    x = x.astype(jnp.float32)
    # Kernel-friendly layouts: weights (in, out), biases (1, out).  These are
    # KB-sized arrays; the transposes are negligible one-off ops (no pass
    # over the batch data).
    w0t, w1t, w2t = w0.T, w1.T, w2.T
    b0r, b1r, b2r = (b0.reshape(1, -1), b1.reshape(1, -1), b2.reshape(1, -1))

    # Large tiles to amortize per-step overhead; keep >= 2 grid steps when B
    # allows so the "parallel" axis can split across both v7x TensorCores.
    tile_b = min(_TILE_B_MAX, max(128, _round_up(_cdiv(B, 2), 128)))
    grid = (_cdiv(B, tile_b),)

    const2 = lambda i: (0, 0)
    weight_specs = [
        pl.BlockSpec((IN_DIM, HIDDEN[0]), const2),
        pl.BlockSpec((1, HIDDEN[0]), const2),
        pl.BlockSpec((HIDDEN[0], HIDDEN[1]), const2),
        pl.BlockSpec((1, HIDDEN[1]), const2),
        pl.BlockSpec((HIDDEN[1], OUT_DIM), const2),
        pl.BlockSpec((1, OUT_DIM), const2),
    ]
    x_spec = pl.BlockSpec((tile_b, IN_DIM), lambda i: (i, 0))
    out_spec = pl.BlockSpec((tile_b, OUT_DIM), lambda i: (i, 0))
    out_shape = jax.ShapeDtypeStruct((B, OUT_DIM), jnp.float32)
    cparams = pltpu.CompilerParams(dimension_semantics=("parallel",))

    if mask is None:
        return pl.pallas_call(
            _mlp_kernel_nomask,
            out_shape=out_shape,
            grid=grid,
            in_specs=[x_spec] + weight_specs,
            out_specs=out_spec,
            compiler_params=cparams,
        )(x, w0t, b0r, w1t, b1r, w2t, b2r)

    # Bool masks travel as int8 (1 B/elem); int / float masks pass unchanged.
    mask_in = mask.astype(jnp.int8) if jnp.issubdtype(mask.dtype, jnp.bool_) else mask
    mask_spec = pl.BlockSpec((tile_b, OUT_DIM), lambda i: (i, 0))
    return pl.pallas_call(
        _mlp_kernel_mask,
        out_shape=out_shape,
        grid=grid,
        in_specs=[x_spec] + weight_specs + [mask_spec],
        out_specs=out_spec,
        compiler_params=cparams,
    )(x, w0t, b0r, w1t, b1r, w2t, b2r, mask_in)


def regression_model_forward(x, params, mask=None, *,
                             min_pallas_batch=_MIN_PALLAS_BATCH):
    """x: (B, IN_DIM) float32. mask: optional (B, OUT_DIM). Returns (B, OUT_DIM)."""
    B = x.shape[0]
    if B == 0 or B < min_pallas_batch:
        # Small-batch fast path: XLA fuses the whole tiny MLP; a pallas_call
        # launch (plus its DMA setup) would dominate here.
        return _forward_jnp(x, params, mask)
    return _forward_pallas(x, params, mask)


# ----------------------------------------------------------------------------
# Self-test
# ----------------------------------------------------------------------------
if __name__ == "__main__":
    key = jax.random.PRNGKey(0)
    k_params, k_x, k_mask, k_xs = jax.random.split(key, 4)

    params = init_params(k_params)

    # --- Pallas path.  B=300 is NOT a multiple of the tile, so the partial
    #     last block (masked writeback) and the 2-step "parallel" grid are
    #     both exercised.
    B = 300
    x = jax.random.normal(k_x, (B, IN_DIM), dtype=jnp.float32)
    mask = (jax.random.uniform(k_mask, (B, OUT_DIM)) > 0.5).astype(jnp.float32)

    y_ref = _forward_jnp(x, params)

    y0 = jax.block_until_ready(
        regression_model_forward(x, params, mask=None, min_pallas_batch=1))
    assert y0.shape == (B, OUT_DIM)
    assert jnp.allclose(y0, y_ref, atol=1e-5, rtol=1e-5), "unmasked mismatch"

    y1 = jax.block_until_ready(
        regression_model_forward(x, params, mask=mask, min_pallas_batch=1))
    assert jnp.allclose(y1, y_ref * mask, atol=1e-5, rtol=1e-5), "masked mismatch"

    # --- Small-batch fast path (default routing for B < 1024).
    Bs = 8
    xs = jax.random.normal(k_xs, (Bs, IN_DIM), dtype=jnp.float32)
    ys = jax.block_until_ready(regression_model_forward(xs, params))
    assert ys.shape == (Bs, OUT_DIM)
    assert jnp.allclose(ys, _forward_jnp(xs, params), atol=1e-5, rtol=1e-5)

    # TODO(synk): nn.Dropout only appears when DROPOUT > 0 (default 0.0); not
    # implemented (inference no-op).

    print("KERNEL_OK")
</pallas_src>

<mosaic_0001>
module attributes {stable_mosaic.version = 11 : i64} {
  func.func @_mlp_kernel_nomask(%arg0: i32, %arg1: memref<256x6xf32, #tpu.memory_space<vmem>>, %arg2: memref<6x64xf32, #tpu.memory_space<vmem>>, %arg3: memref<1x64xf32, #tpu.memory_space<vmem>>, %arg4: memref<64x32xf32, #tpu.memory_space<vmem>>, %arg5: memref<1x32xf32, #tpu.memory_space<vmem>>, %arg6: memref<32x8xf32, #tpu.memory_space<vmem>>, %arg7: memref<1x8xf32, #tpu.memory_space<vmem>>, %arg8: memref<256x8xf32, #tpu.memory_space<vmem>>) attributes {dimension_semantics = [#tpu.dimension_semantics<parallel>], iteration_bounds = array<i64: 2>, scalar_prefetch = 0 : i64, scratch_operands = 0 : i64, tpu.core_type = #tpu.core_type<tc>, window_params = [{transform_indices = @transform_0, window_bounds = array<i64: 256, 6>}, {pipeline_mode = #tpu.pipeline_mode<synchronous>, transform_indices = @transform_1, window_bounds = array<i64: 6, 64>}, {pipeline_mode = #tpu.pipeline_mode<synchronous>, transform_indices = @transform_2, window_bounds = array<i64: 1, 64>}, {pipeline_mode = #tpu.pipeline_mode<synchronous>, transform_indices = @transform_3, window_bounds = array<i64: 64, 32>}, {pipeline_mode = #tpu.pipeline_mode<synchronous>, transform_indices = @transform_4, window_bounds = array<i64: 1, 32>}, {pipeline_mode = #tpu.pipeline_mode<synchronous>, transform_indices = @transform_5, window_bounds = array<i64: 32, 8>}, {pipeline_mode = #tpu.pipeline_mode<synchronous>, transform_indices = @transform_6, window_bounds = array<i64: 1, 8>}, {transform_indices = @transform_7, window_bounds = array<i64: 256, 8>}]} {
    %c0 = arith.constant 0 : index
    %c0_0 = arith.constant 0 : index
    %0 = vector.load %arg1[%c0, %c0_0] : memref<256x6xf32, #tpu.memory_space<vmem>>, vector<256x6xf32>
    %c0_1 = arith.constant 0 : index
    %c0_2 = arith.constant 0 : index
    %1 = vector.load %arg2[%c0_1, %c0_2] : memref<6x64xf32, #tpu.memory_space<vmem>>, vector<6x64xf32>
    %cst = arith.constant dense<0.000000e+00> : vector<256x64xf32>
    %2 = tpu.matmul %0, %1, %cst {dimension_numbers = #tpu.dot_dimension_numbers<[1], [0], [0], [1], [0, 0, 1, 1], [], []>} : vector<256x6xf32>, vector<6x64xf32>, vector<256x64xf32> -> vector<256x64xf32>
    %c0_3 = arith.constant 0 : index
    %c0_4 = arith.constant 0 : index
    %3 = vector.load %arg3[%c0_3, %c0_4] : memref<1x64xf32, #tpu.memory_space<vmem>>, vector<1x64xf32>
    %4 = vector.broadcast %3 : vector<1x64xf32> to vector<256x64xf32>
    %5 = arith.addf %2, %4 : vector<256x64xf32>
    %cst_5 = arith.constant 0.000000e+00 : f32
    %6 = vector.broadcast %cst_5 : f32 to vector<256x64xf32>
    %7 = arith.maximumf %5, %6 : vector<256x64xf32>
    %c0_6 = arith.constant 0 : index
    %c0_7 = arith.constant 0 : index
    %8 = vector.load %arg4[%c0_6, %c0_7] : memref<64x32xf32, #tpu.memory_space<vmem>>, vector<64x32xf32>
    %cst_8 = arith.constant dense<0.000000e+00> : vector<256x32xf32>
    %9 = tpu.matmul %7, %8, %cst_8 {dimension_numbers = #tpu.dot_dimension_numbers<[1], [0], [0], [1], [0, 0, 1, 1], [], []>} : vector<256x64xf32>, vector<64x32xf32>, vector<256x32xf32> -> vector<256x32xf32>
    %c0_9 = arith.constant 0 : index
    %c0_10 = arith.constant 0 : index
    %10 = vector.load %arg5[%c0_9, %c0_10] : memref<1x32xf32, #tpu.memory_space<vmem>>, vector<1x32xf32>
    %11 = vector.broadcast %10 : vector<1x32xf32> to vector<256x32xf32>
    %12 = arith.addf %9, %11 : vector<256x32xf32>
    %cst_11 = arith.constant 0.000000e+00 : f32
    %13 = vector.broadcast %cst_11 : f32 to vector<256x32xf32>
    %14 = arith.maximumf %12, %13 : vector<256x32xf32>
    %c0_12 = arith.constant 0 : index
    %c0_13 = arith.constant 0 : index
    %15 = vector.load %arg6[%c0_12, %c0_13] : memref<32x8xf32, #tpu.memory_space<vmem>>, vector<32x8xf32>
    %cst_14 = arith.constant dense<0.000000e+00> : vector<256x8xf32>
    %16 = tpu.matmul %14, %15, %cst_14 {dimension_numbers = #tpu.dot_dimension_numbers<[1], [0], [0], [1], [0, 0, 1, 1], [], []>} : vector<256x32xf32>, vector<32x8xf32>, vector<256x8xf32> -> vector<256x8xf32>
    %c0_15 = arith.constant 0 : index
    %c0_16 = arith.constant 0 : index
    %17 = vector.load %arg7[%c0_15, %c0_16] : memref<1x8xf32, #tpu.memory_space<vmem>>, vector<1x8xf32>
    %18 = vector.broadcast %17 : vector<1x8xf32> to vector<256x8xf32>
    %19 = arith.addf %16, %18 : vector<256x8xf32>
    %cst_17 = arith.constant 0.000000e+00 : f32
    %cst_18 = arith.constant 1.000000e+01 : f32
    %20 = vector.broadcast %cst_17 : f32 to vector<256x8xf32>
    %21 = arith.maximumf %20, %19 : vector<256x8xf32>
    %22 = vector.broadcast %cst_18 : f32 to vector<256x8xf32>
    %23 = arith.minimumf %22, %21 : vector<256x8xf32>
    %c0_19 = arith.constant 0 : index
    %c0_20 = arith.constant 0 : index
    %24 = vector.load %arg8[%c0_19, %c0_20] : memref<256x8xf32, #tpu.memory_space<vmem>>, vector<256x8xf32>
    tpu.vector_store %arg8[%c0_19, %c0_20], %23 {strides = array<i32>} : memref<256x8xf32, #tpu.memory_space<vmem>>, vector<256x8xf32>,
    return
  }
  func.func @transform_0(%arg0: i32) -> (i32, i32) {
    %c0_i32 = arith.constant 0 : i32
    %c0_i32_0 = arith.constant 0 : i32
    return %arg0, %c0_i32 : i32, i32
  }
  func.func @transform_1(%arg0: i32) -> (i32, i32) {
    %c0_i32 = arith.constant 0 : i32
    %c0_i32_0 = arith.constant 0 : i32
    %c0_i32_1 = arith.constant 0 : i32
    return %c0_i32, %c0_i32_0 : i32, i32
  }
  func.func @transform_2(%arg0: i32) -> (i32, i32) {
    %c0_i32 = arith.constant 0 : i32
    %c0_i32_0 = arith.constant 0 : i32
    %c0_i32_1 = arith.constant 0 : i32
    return %c0_i32, %c0_i32_0 : i32, i32
  }
  func.func @transform_3(%arg0: i32) -> (i32, i32) {
    %c0_i32 = arith.constant 0 : i32
    %c0_i32_0 = arith.constant 0 : i32
    %c0_i32_1 = arith.constant 0 : i32
    return %c0_i32, %c0_i32_0 : i32, i32
  }
  func.func @transform_4(%arg0: i32) -> (i32, i32) {
    %c0_i32 = arith.constant 0 : i32
    %c0_i32_0 = arith.constant 0 : i32
    %c0_i32_1 = arith.constant 0 : i32
    return %c0_i32, %c0_i32_0 : i32, i32
  }
  func.func @transform_5(%arg0: i32) -> (i32, i32) {
    %c0_i32 = arith.constant 0 : i32
    %c0_i32_0 = arith.constant 0 : i32
    %c0_i32_1 = arith.constant 0 : i32
    return %c0_i32, %c0_i32_0 : i32, i32
  }
  func.func @transform_6(%arg0: i32) -> (i32, i32) {
    %c0_i32 = arith.constant 0 : i32
    %c0_i32_0 = arith.constant 0 : i32
    %c0_i32_1 = arith.constant 0 : i32
    return %c0_i32, %c0_i32_0 : i32, i32
  }
  func.func @transform_7(%arg0: i32) -> (i32, i32) {
    %c0_i32 = arith.constant 0 : i32
    %c0_i32_0 = arith.constant 0 : i32
    return %arg0, %c0_i32 : i32, i32
  }
}

</mosaic_0001>

<llo_original>
// kernel: tpu_custom_call.1
$region0: #{tpu_custom_call.1}
  #allocation0 [shape = 'u32[]', space=smem, size = 0x4, offset = 0x4, fixed_abs, tag = 'smem constant byte address 0x4 - core index']
  #allocation1 [shape = 'u32[144,128]{1,0:T(1,128)}', space=vmem, size = 0x12000, scoped, tag = 'internal scratch']
  %s0 = inlined_call_operand.vmem [shape: f32[300,6], index: 0, kind: input, shape index: {}]
  %s1 = inlined_call_operand.vmem [shape: f32[6,64], index: 1, kind: input, shape index: {}]
  %s2 = inlined_call_operand.vmem [shape: f32[1,64], index: 2, kind: input, shape index: {}]
  %s3 = inlined_call_operand.vmem [shape: f32[64,32], index: 3, kind: input, shape index: {}]
  %s4 = inlined_call_operand.vmem [shape: f32[1,32], index: 4, kind: input, shape index: {}]
  %s5 = inlined_call_operand.vmem [shape: f32[32,8], index: 5, kind: input, shape index: {}]
  %s6 = inlined_call_operand.vmem [shape: f32[1,8], index: 6, kind: input, shape index: {}]
  %s7 = inlined_call_operand.vmem [shape: f32[300,8], index: 7, kind: output, shape index: {}]
  %s8 = sld [smem:[#allocation0]]
  $region109: #{tpu_custom_call.1} parent=0
    _
  %s10 = ssub.s32 1, %s8
  %s11 = scalar_select 0, %s10, %s8
  $region1: #{tpu_custom_call.1} parent=0
    #allocation2 [shape = 'u8[262144]{0}', space=vmem, size = 0x40000, scoped, tag = 'output window, operand 0']
    loop: start=0, step=1, limit=4
    $region2: #{tpu_custom_call.1} parent=1 // loop_pre_header
      _
    $region3: #{tpu_custom_call.1} parent=1 // loop_header
      %s13 = sphi 0, %s17
      %p14 = scmp.ge.s32.totalorder %s13, 4
      %s23 = sphi 0, %s25
      %s26 = sphi 0, %s23
      %s27 = sphi 0, %s26
      %s43 = sphi 0, %s27
      %s47 = sphi 0, %s47
      %s49 = sphi 0, %s47
      %s50 = sphi 0, %s49
      %s64 = sphi 0, %s50
      %s68 = sphi 0, %s68
      %s70 = sphi 0, %s68
      %s71 = sphi 0, %s70
      %s85 = sphi 0, %s71
      %s89 = sphi 0, %s89
      %s91 = sphi 0, %s89
      %s92 = sphi 0, %s91
      %s106 = sphi 0, %s92
      %s110 = sphi 0, %s110
      %s112 = sphi 0, %s110
      %s113 = sphi 0, %s112
      %s127 = sphi 0, %s113
      %s131 = sphi 0, %s131
      %s133 = sphi 0, %s131
      %s134 = sphi 0, %s133
      %s148 = sphi 0, %s134
      %s152 = sphi 0, %s152
      %s154 = sphi 0, %s152
      %s155 = sphi 0, %s154
      %s169 = sphi 0, %s155
      %s175 = sphi 0, %s177
      %s178 = sphi 0, %s175
      %s179 = sphi 0, %s178
      %s195 = sphi 0, %s179
    $region4: #{tpu_custom_call.1} parent=1 // loop_header_branch
      %16 = sbr.rel (%p14) target = $region8
    $region5: #{tpu_custom_call.1} parent=1 // loop_body
      %s18 = ssub.s32 %s13, 1
      %s19 = ssub.s32 %s13, 2
      %s20 = sadd.s32 %s13, 1
      %s21 = ssub.s32 %s13, %s20
      %p22 = scmp.eq.s32.totalorder %s21, 0
      %s24 = sadd.s32 %s23, 1
      %s25 = scalar_select %p22, %s23, %s24
      %p28 = pneg %p22
      %p29 = scmp.eq.s32.totalorder %s13, 1
      %p30 = por %p28, %p29
      %p31 = scmp.ne.s32.totalorder %s23, %s26
      %p32 = scmp.eq.s32.totalorder %s13, 0
      %p33 = por %p31, %p32
      %p34 = scmp.ne.s32.totalorder %s23, %s26
      %p35 = scmp.eq.s32.totalorder %s18, 1
      %p36 = por %p34, %p35
      %p37 = scmp.ne.s32.totalorder %s26, %s27
      %p38 = scmp.eq.s32.totalorder %s18, 0
      %p39 = por %p37, %p38
      %p40 = scmp.ne.s32.totalorder %s26, %s27
      %p41 = scmp.eq.s32.totalorder %s19, 1
      %p42 = por %p40, %p41
      %p44 = scmp.ne.s32.totalorder %s27, %s43
      %p45 = scmp.eq.s32.totalorder %s19, 0
      %p46 = por %p44, %p45
      %s48 = sadd.s32 %s47, 1
      %p51 = scmp.eq.s32.totalorder %s13, 1
      %p52 = scmp.ne.s32.totalorder %s47, %s49
      %p53 = scmp.eq.s32.totalorder %s13, 0
      %p54 = por %p52, %p53
      %p55 = scmp.ne.s32.totalorder %s47, %s49
      %p56 = scmp.eq.s32.totalorder %s18, 1
      %p57 = por %p55, %p56
      %p58 = scmp.ne.s32.totalorder %s49, %s50
      %p59 = scmp.eq.s32.totalorder %s18, 0
      %p60 = por %p58, %p59
      %p61 = scmp.ne.s32.totalorder %s49, %s50
      %p62 = scmp.eq.s32.totalorder %s19, 1
      %p63 = por %p61, %p62
      %p65 = scmp.ne.s32.totalorder %s50, %s64
      %p66 = scmp.eq.s32.totalorder %s19, 0
      %p67 = por %p65, %p66
      %s69 = sadd.s32 %s68, 1
      %p72 = scmp.eq.s32.totalorder %s13, 1
      %p73 = scmp.ne.s32.totalorder %s68, %s70
      %p74 = scmp.eq.s32.totalorder %s13, 0
      %p75 = por %p73, %p74
      %p76 = scmp.ne.s32.totalorder %s68, %s70
      %p77 = scmp.eq.s32.totalorder %s18, 1
      %p78 = por %p76, %p77
      %p79 = scmp.ne.s32.totalorder %s70, %s71
      %p80 = scmp.eq.s32.totalorder %s18, 0
      %p81 = por %p79, %p80
      %p82 = scmp.ne.s32.totalorder %s70, %s71
      %p83 = scmp.eq.s32.totalorder %s19, 1
      %p84 = por %p82, %p83
      %p86 = scmp.ne.s32.totalorder %s71, %s85
      %p87 = scmp.eq.s32.totalorder %s19, 0
      %p88 = por %p86, %p87
      %s90 = sadd.s32 %s89, 1
      %p93 = scmp.eq.s32.totalorder %s13, 1
      %p94 = scmp.ne.s32.totalorder %s89, %s91
      %p95 = scmp.eq.s32.totalorder %s13, 0
      %p96 = por %p94, %p95
      %p97 = scmp.ne.s32.totalorder %s89, %s91
      %p98 = scmp.eq.s32.totalorder %s18, 1
      %p99 = por %p97, %p98
      %p100 = scmp.ne.s32.totalorder %s91, %s92
      %p101 = scmp.eq.s32.totalorder %s18, 0
      %p102 = por %p100, %p101
      %p103 = scmp.ne.s32.totalorder %s91, %s92
      %p104 = scmp.eq.s32.totalorder %s19, 1
      %p105 = por %p103, %p104
      %p107 = scmp.ne.s32.totalorder %s92, %s106
      %p108 = scmp.eq.s32.totalorder %s19, 0
      %p109 = por %p107, %p108
      %s111 = sadd.s32 %s110, 1
      %p114 = scmp.eq.s32.totalorder %s13, 1
      %p115 = scmp.ne.s32.totalorder %s110, %s112
      %p116 = scmp.eq.s32.totalorder %s13, 0
      %p117 = por %p115, %p116
      %p118 = scmp.ne.s32.totalorder %s110, %s112
      %p119 = scmp.eq.s32.totalorder %s18, 1
      %p120 = por %p118, %p119
      %p121 = scmp.ne.s32.totalorder %s112, %s113
      %p122 = scmp.eq.s32.totalorder %s18, 0
      %p123 = por %p121, %p122
      %p124 = scmp.ne.s32.totalorder %s112, %s113
      %p125 = scmp.eq.s32.totalorder %s19, 1
      %p126 = por %p124, %p125
      %p128 = scmp.ne.s32.totalorder %s113, %s127
      %p129 = scmp.eq.s32.totalorder %s19, 0
      %p130 = por %p128, %p129
      %s132 = sadd.s32 %s131, 1
      %p135 = scmp.eq.s32.totalorder %s13, 1
      %p136 = scmp.ne.s32.totalorder %s131, %s133
      %p137 = scmp.eq.s32.totalorder %s13, 0
      %p138 = por %p136, %p137
      %p139 = scmp.ne.s32.totalorder %s131, %s133
      %p140 = scmp.eq.s32.totalorder %s18, 1
      %p141 = por %p139, %p140
      %p142 = scmp.ne.s32.totalorder %s133, %s134
      %p143 = scmp.eq.s32.totalorder %s18, 0
      %p144 = por %p142, %p143
      %p145 = scmp.ne.s32.totalorder %s133, %s134
      %p146 = scmp.eq.s32.totalorder %s19, 1
      %p147 = por %p145, %p146
      %p149 = scmp.ne.s32.totalorder %s134, %s148
      %p150 = scmp.eq.s32.totalorder %s19, 0
      %p151 = por %p149, %p150
      %s153 = sadd.s32 %s152, 1
      %p156 = scmp.eq.s32.totalorder %s13, 1
      %p157 = scmp.ne.s32.totalorder %s152, %s154
      %p158 = scmp.eq.s32.totalorder %s13, 0
      %p159 = por %p157, %p158
      %p160 = scmp.ne.s32.totalorder %s152, %s154
      %p161 = scmp.eq.s32.totalorder %s18, 1
      %p162 = por %p160, %p161
      %p163 = scmp.ne.s32.totalorder %s154, %s155
      %p164 = scmp.eq.s32.totalorder %s18, 0
      %p165 = por %p163, %p164
      %p166 = scmp.ne.s32.totalorder %s154, %s155
      %p167 = scmp.eq.s32.totalorder %s19, 1
      %p168 = por %p166, %p167
      %p170 = scmp.ne.s32.totalorder %s155, %s169
      %p171 = scmp.eq.s32.totalorder %s19, 0
      %p172 = por %p170, %p171
      %s173 = ssub.s32 %s13, %s20
      %p174 = scmp.eq.s32.totalorder %s173, 0
      %s176 = sadd.s32 %s175, 1
      %s177 = scalar_select %p174, %s175, %s176
      %p180 = pneg %p174
      %p181 = scmp.eq.s32.totalorder %s13, 1
      %p182 = por %p180, %p181
      %p183 = scmp.ne.s32.totalorder %s175, %s178
      %p184 = scmp.eq.s32.totalorder %s13, 0
      %p185 = por %p183, %p184
      %p186 = scmp.ne.s32.totalorder %s175, %s178
      %p187 = scmp.eq.s32.totalorder %s18, 1
      %p188 = por %p186, %p187
      %p189 = scmp.ne.s32.totalorder %s178, %s179
      %p190 = scmp.eq.s32.totalorder %s18, 0
      %p191 = por %p189, %p190
      %p192 = scmp.ne.s32.totalorder %s178, %s179
      %p193 = scmp.eq.s32.totalorder %s19, 1
      %p194 = por %p192, %p193
      %p196 = scmp.ne.s32.totalorder %s179, %s195
      %p197 = scmp.eq.s32.totalorder %s19, 0
      %p198 = por %p196, %p197
      %p199 = scmp.le.s32.totalorder 1, %s13
      %p200 = scmp.lt.s32.totalorder %s13, 3
      %p201 = pnand %p199, %p200
      %p202 = pneg %p201
      // Predicated region
      $region9: #{tpu_custom_call.1} parent=5 // pred_check
        _
      $region10: #{tpu_custom_call.1} parent=5 // pred_check_branch
        %204 = sbr.rel (%p201) target = $region12
      $region11: #{tpu_custom_call.1} parent=5 // pred_region
        %s205 = ssub.s32 %s13, 1
        // Predicated region
        $region13: #{tpu_custom_call.1} parent=11 // pred_check
          %p206 = pneg %p60
        $region14: #{tpu_custom_call.1} parent=11 // pred_check_branch
          %208 = sbr.rel (%p206) target = $region16
        $region15: #{tpu_custom_call.1} parent=11 // pred_region
          _
        $region16: #{tpu_custom_call.1} parent=11 // pred_fallthru
          _
        // Predicated region
        $region17: #{tpu_custom_call.1} parent=11 // pred_check
          %p209 = pneg %p81
        $region18: #{tpu_custom_call.1} parent=11 // pred_check_branch
          %211 = sbr.rel (%p209) target = $region20
        $region19: #{tpu_custom_call.1} parent=11 // pred_region
          _
        $region20: #{tpu_custom_call.1} parent=11 // pred_fallthru
          _
        // Predicated region
        $region21: #{tpu_custom_call.1} parent=11 // pred_check
          %p212 = pneg %p102
        $region22: #{tpu_custom_call.1} parent=11 // pred_check_branch
          %214 = sbr.rel (%p212) target = $region24
        $region23: #{tpu_custom_call.1} parent=11 // pred_region
          _
        $region24: #{tpu_custom_call.1} parent=11 // pred_fallthru
          _
        // Predicated region
        $region25: #{tpu_custom_call.1} parent=11 // pred_check
          %p215 = pneg %p123
        $region26: #{tpu_custom_call.1} parent=11 // pred_check_branch
          %217 = sbr.rel (%p215) target = $region28
        $region27: #{tpu_custom_call.1} parent=11 // pred_region
          _
        $region28: #{tpu_custom_call.1} parent=11 // pred_fallthru
          _
        // Predicated region
        $region29: #{tpu_custom_call.1} parent=11 // pred_check
          %p218 = pneg %p144
        $region30: #{tpu_custom_call.1} parent=11 // pred_check_branch
          %220 = sbr.rel (%p218) target = $region32
        $region31: #{tpu_custom_call.1} parent=11 // pred_region
          _
        $region32: #{tpu_custom_call.1} parent=11 // pred_fallthru
          _
        // Predicated region
        $region33: #{tpu_custom_call.1} parent=11 // pred_check
          %p221 = pneg %p165
        $region34: #{tpu_custom_call.1} parent=11 // pred_check_branch
          %223 = sbr.rel (%p221) target = $region36
        $region35: #{tpu_custom_call.1} parent=11 // pred_region
          _
        $region36: #{tpu_custom_call.1} parent=11 // pred_fallthru
          _
      $region12: #{tpu_custom_call.1} parent=5 // pred_fallthru
        _
      %p224 = scmp.lt.s32.totalorder %s13, 2
      // Predicated region
      $region37: #{tpu_custom_call.1} parent=5 // pred_check
        %p225 = pneg %p224
      $region38: #{tpu_custom_call.1} parent=5 // pred_check_branch
        %227 = sbr.rel (%p225) target = $region40
      $region39: #{tpu_custom_call.1} parent=5 // pred_region
        // Predicated region
        $region41: #{tpu_custom_call.1} parent=39 // pred_check
          %p228 = pneg %p33
        $region42: #{tpu_custom_call.1} parent=39 // pred_check_branch
          %230 = sbr.rel (%p228) target = $region44
        $region43: #{tpu_custom_call.1} parent=39 // pred_region
          %s231 = smul.u32 32, %s13
          %s232 = ssub.s32 38, %s231
          %p233 = scmp.lt.s32.totalorder %s232, 32
          %s234 = scalar_select %p233, %s232, 32
          %s235 = smul.u32 128, %s234
          %p236 = scmp.lt.s32.totalorder %s231, 37
          %s237 = scalar_select %p236, %s231, 37
          %s238 = smul.addr %s237, 8
          %s239 = scalar_lea.vmem %s0, %s238
          %s240 = smul.u32 32, %s13
          %s241 = ssub.s32 38, %s240
          %p242 = scmp.lt.s32.totalorder %s241, 32
          %s243 = scalar_select %p242, %s241, 32
          %s244 = smul.u32 128, %s243
        $region44: #{tpu_custom_call.1} parent=39 // pred_fallthru
          _
      $region40: #{tpu_custom_call.1} parent=5 // pred_fallthru
        _
      %p245 = scmp.le.s32.totalorder 1, %s13
      %p246 = scmp.lt.s32.totalorder %s13, 3
      %p247 = pnand %p245, %p246
      %p248 = pneg %p247
      // Predicated region
      $region45: #{tpu_custom_call.1} parent=5 // pred_check
        _
      $region46: #{tpu_custom_call.1} parent=5 // pred_check_branch
        %250 = sbr.rel (%p247) target = $region48
      $region47: #{tpu_custom_call.1} parent=5 // pred_region
        %s251 = ssub.s32 %s13, 1
        %s252 = smul.u32 32, %s18
        %s253 = ssub.s32 38, %s252
        %p254 = scmp.lt.s32.totalorder %s253, 32
        %s255 = scalar_select %p254, %s253, 32
        %s256 = smul.u32 128, %s255
        %p257 = scmp.lt.s32.totalorder %s252, 37
        %s258 = scalar_select %p257, %s252, 37
        %s259 = smul.addr %s258, 8
        %s260 = scalar_lea.vmem %s0, %s259
        %p261 = pneg %p39
        %p262 = pneg %p36
        %p263 = pneg %p60
        %p264 = pneg %p57
        %p265 = pneg %p81
        %p266 = pneg %p78
        %p267 = pneg %p102
        %p268 = pneg %p99
        %p269 = pneg %p123
        %p270 = pneg %p120
        %p271 = pneg %p144
        %p272 = pneg %p141
        %p273 = pneg %p165
        %p274 = pneg %p162
        %p275 = pneg %p191
        %p276 = pneg %p188
        %s277 = sand.u32 %s178, 1
        %s278 = sand.u32 %s178, 1
        %s279 = smul.addr %s278, 256
        %s280 = scalar_lea.vmem [#allocation2], %s279
        %s281 = smul.u32 32, %s18
        %s282 = ssub.s32 38, %s281
        %p283 = scmp.lt.s32.totalorder %s282, 32
        %s284 = scalar_select %p283, %s282, 32
        %s285 = smul.u32 128, %s284
        %p286 = scmp.lt.s32.totalorder %s281, 37
        %s287 = scalar_select %p286, %s281, 37
        %s288 = smul.addr %s287, 8
        %s289 = scalar_lea.vmem %s0, %s288
        %s290 = smul.u32 32, %s18
        %s291 = ssub.s32 38, %s290
        %p292 = scmp.lt.s32.totalorder %s291, 32
        %s293 = scalar_select %p292, %s291, 32
        %s294 = smul.u32 128, %s293
        %s295 = smul.u32 32, %s18
        %s296 = ssub.s32 38, %s295
        %p297 = scmp.lt.s32.totalorder %s296, 32
        %s298 = scalar_select %p297, %s296, 32
        %s299 = smul.u32 128, %s298
        %v300 = vld [vmem:[%s289] sm:$0xff]
        %v301 = vld [vmem:[%s289 + $0x8] sm:$0xff]
        %v302 = vld [vmem:[%s289 + $0x10] sm:$0xff]
        %v303 = vld [vmem:[%s289 + $0x18] sm:$0xff]
        %v304 = vld [vmem:[%s289 + $0x20] sm:$0xff]
        %v305 = vld [vmem:[%s289 + $0x28] sm:$0xff]
        %v306 = vld [vmem:[%s289 + $0x30] sm:$0xff]
        %v307 = vld [vmem:[%s289 + $0x38] sm:$0xff]
        %v308 = vld [vmem:[%s289 + $0x40] sm:$0xff]
        %v309 = vld [vmem:[%s289 + $0x48] sm:$0xff]
        %v310 = vld [vmem:[%s289 + $0x50] sm:$0xff]
        %v311 = vld [vmem:[%s289 + $0x58] sm:$0xff]
        %v312 = vld [vmem:[%s289 + $0x60] sm:$0xff]
        %v313 = vld [vmem:[%s289 + $0x68] sm:$0xff]
        %v314 = vld [vmem:[%s289 + $0x70] sm:$0xff]
        %v315 = vld [vmem:[%s289 + $0x78] sm:$0xff]
        %v316 = vld [vmem:[%s289 + $0x80] sm:$0xff]
        %v317 = vld [vmem:[%s289 + $0x88] sm:$0xff]
        %v318 = vld [vmem:[%s289 + $0x90] sm:$0xff]
        %v319 = vld [vmem:[%s289 + $0x98] sm:$0xff]
        %v320 = vld [vmem:[%s289 + $0xa0] sm:$0xff]
        %v321 = vld [vmem:[%s289 + $0xa8] sm:$0xff]
        %v322 = vld [vmem:[%s289 + $0xb0] sm:$0xff]
        %v323 = vld [vmem:[%s289 + $0xb8] sm:$0xff]
        %v324 = vld [vmem:[%s289 + $0xc0] sm:$0xff]
        %v325 = vld [vmem:[%s289 + $0xc8] sm:$0xff]
        %v326 = vld [vmem:[%s289 + $0xd0] sm:$0xff]
        %v327 = vld [vmem:[%s289 + $0xd8] sm:$0xff]
        %v328 = vld [vmem:[%s289 + $0xe0] sm:$0xff]
        %v329 = vld [vmem:[%s289 + $0xe8] sm:$0xff]
        %v330 = vld [vmem:[%s289 + $0xf0] sm:$0xff]
        %v331 = vld [vmem:[%s289 + $0xf8] sm:$0xff]
        %v332 = vld [vmem:[%s1] sm:$0x3f]
        %v333 = vld [vmem:[%s2] sm:$0x1]
        %v335 = vlaneseq
        %v336 = vshrl.u32 %v335, 7
        %v337 = vsub.s32 0, %v336
        %v338 = vrot.slane %v333, %v337
        %vm340 = vcmask 48128
        %v342 = vsel %vm340, %v300, 0
        %v345 = vsel %vm340, %v301, 0
        %v348 = vsel %vm340, %v302, 0
        %v351 = vsel %vm340, %v303, 0
        %v354 = vsel %vm340, %v304, 0
        %v357 = vsel %vm340, %v305, 0
        %v360 = vsel %vm340, %v306, 0
        %v363 = vsel %vm340, %v307, 0
        %v366 = vsel %vm340, %v308, 0
        %v369 = vsel %vm340, %v309, 0
        %v372 = vsel %vm340, %v310, 0
        %v375 = vsel %vm340, %v311, 0
        %v378 = vsel %vm340, %v312, 0
        %v381 = vsel %vm340, %v313, 0
        %v384 = vsel %vm340, %v314, 0
        %v387 = vsel %vm340, %v315, 0
        %v390 = vsel %vm340, %v316, 0
        %v393 = vsel %vm340, %v317, 0
        %v396 = vsel %vm340, %v318, 0
        %v399 = vsel %vm340, %v319, 0
        %v402 = vsel %vm340, %v320, 0
        %v405 = vsel %vm340, %v321, 0
        %v408 = vsel %vm340, %v322, 0
        %v411 = vsel %vm340, %v323, 0
        %v414 = vsel %vm340, %v324, 0
        %v417 = vsel %vm340, %v325, 0
        %v420 = vsel %vm340, %v326, 0
        %v423 = vsel %vm340, %v327, 0
        %v426 = vsel %vm340, %v328, 0
        %v429 = vsel %vm340, %v329, 0
        %v432 = vsel %vm340, %v330, 0
        %v435 = vsel %vm340, %v331, 0
        %vm437 = vcmask 1045504
        %v439 = vsel %vm437, %v332, 0
        %441 = vmatprep.subr.mxu0 0.0
        %442 = vmatpush1.msra.mxu0 0.0
        %443 = vmatprep.subr.mxu0 0.0
        %444 = vmatpush1.msra.mxu0 0.0
        %445 = vmatprep.subr.mxu0 0.0
        %446 = vmatpush1.msra.mxu0 0.0
        %447 = vmatprep.subr.mxu0 0.0
        %448 = vmatpush1.msra.mxu0 0.0
        %449 = vmatprep.subr.mxu0 0.0
        %450 = vmatpush1.msra.mxu0 0.0
        %451 = vmatprep.subr.mxu0 0.0
        %452 = vmatpush1.msra.mxu0 0.0
        %453 = vmatprep.subr.mxu0 0.0
        %454 = vmatpush1.msra.mxu0 0.0
        %455 = vmatprep.subr.mxu0 0.0
        %456 = vmatpush1.msra.mxu0 0.0
        %457 = vmatprep.subr.mxu0 0.0
        %458 = vmatpush1.msra.mxu0 0.0
        %459 = vmatprep.subr.mxu0 0.0
        %460 = vmatpush1.msra.mxu0 0.0
        %461 = vmatprep.subr.mxu0 0.0
        %462 = vmatpush1.msra.mxu0 0.0
        %463 = vmatprep.subr.mxu0 0.0
        %464 = vmatpush1.msra.mxu0 0.0
        %465 = vmatprep.subr.mxu0 0.0
        %466 = vmatpush1.msra.mxu0 0.0
        %467 = vmatprep.subr.mxu0 0.0
        %468 = vmatpush1.msra.mxu0 0.0
        %469 = vmatprep.subr.mxu0 0.0
        %470 = vmatpush1.msra.mxu0 0.0
        %471 = vmatprep.subr.mxu0 0.0
        %472 = vmatpush1.msra.mxu0 %v439
        %473 = vmatprep.subr.mxu0 0.0
        %474 = vmatpush2.msra.mxu0 0.0
        %475 = vmatprep.subr.mxu0 0.0
        %476 = vmatpush2.msra.mxu0 0.0
        %477 = vmatprep.subr.mxu0 0.0
        %478 = vmatpush2.msra.mxu0 0.0
        %479 = vmatprep.subr.mxu0 0.0
        %480 = vmatpush2.msra.mxu0 0.0
        %481 = vmatprep.subr.mxu0 0.0
        %482 = vmatpush2.msra.mxu0 0.0
        %483 = vmatprep.subr.mxu0 0.0
        %484 = vmatpush2.msra.mxu0 0.0
        %485 = vmatprep.subr.mxu0 0.0
        %486 = vmatpush2.msra.mxu0 0.0
        %487 = vmatprep.subr.mxu0 0.0
        %488 = vmatpush2.msra.mxu0 0.0
        %489 = vmatprep.subr.mxu0 0.0
        %490 = vmatpush2.msra.mxu0 0.0
        %491 = vmatprep.subr.mxu0 0.0
        %492 = vmatpush2.msra.mxu0 0.0
        %493 = vmatprep.subr.mxu0 0.0
        %494 = vmatpush2.msra.mxu0 0.0
        %495 = vmatprep.subr.mxu0 0.0
        %496 = vmatpush2.msra.mxu0 0.0
        %497 = vmatprep.subr.mxu0 0.0
        %498 = vmatpush2.msra.mxu0 0.0
        %499 = vmatprep.subr.mxu0 0.0
        %500 = vmatpush2.msra.mxu0 0.0
        %501 = vmatprep.subr.mxu0 0.0
        %502 = vmatpush2.msra.mxu0 0.0
        %503 = vmatprep.subr.mxu0 0.0
        %504 = vmatpush2.msra.mxu0 0.0
        %505 = vmatprep.mubr.f32.mxu0 0.0
        %506 = vmatmul.mubr.f32.gmra.mxu0 %v342
        %v507 = vpop.f32.mrf.mxu0
        %v508 = vadd.f32 %v338, %v507
        %v509 = vpop.f32.mrf.mxu0
        %510 = vmatprep.mubr.f32.mxu0 0.0
        %511 = vmatmul.mubr.f32.gmra.mxu0 %v345
        %v512 = vpop.f32.mrf.mxu0
        %v513 = vadd.f32 %v338, %v512
        %v514 = vpop.f32.mrf.mxu0
        %515 = vmatprep.mubr.f32.mxu0 0.0
        %516 = vmatmul.mubr.f32.gmra.mxu0 %v348
        %v517 = vpop.f32.mrf.mxu0
        %v518 = vadd.f32 %v338, %v517
        %v519 = vpop.f32.mrf.mxu0
        %520 = vmatprep.mubr.f32.mxu0 0.0
        %521 = vmatmul.mubr.f32.gmra.mxu0 %v351
        %v522 = vpop.f32.mrf.mxu0
        %v523 = vadd.f32 %v338, %v522
        %v524 = vpop.f32.mrf.mxu0
        %525 = vmatprep.mubr.f32.mxu0 0.0
        %526 = vmatmul.mubr.f32.gmra.mxu0 %v354
        %v527 = vpop.f32.mrf.mxu0
        %v528 = vadd.f32 %v338, %v527
        %v529 = vpop.f32.mrf.mxu0
        %530 = vmatprep.mubr.f32.mxu0 0.0
        %531 = vmatmul.mubr.f32.gmra.mxu0 %v357
        %v532 = vpop.f32.mrf.mxu0
        %v533 = vadd.f32 %v338, %v532
        %v534 = vpop.f32.mrf.mxu0
        %535 = vmatprep.mubr.f32.mxu0 0.0
        %536 = vmatmul.mubr.f32.gmra.mxu0 %v360
        %v537 = vpop.f32.mrf.mxu0
        %v538 = vadd.f32 %v338, %v537
        %v539 = vpop.f32.mrf.mxu0
        %540 = vmatprep.mubr.f32.mxu0 0.0
        %541 = vmatmul.mubr.f32.gmra.mxu0 %v363
        %v542 = vpop.f32.mrf.mxu0
        %v543 = vadd.f32 %v338, %v542
        %v544 = vpop.f32.mrf.mxu0
        %545 = vmatprep.mubr.f32.mxu0 0.0
        %546 = vmatmul.mubr.f32.gmra.mxu0 %v366
        %v547 = vpop.f32.mrf.mxu0
        %v548 = vadd.f32 %v338, %v547
        %v549 = vpop.f32.mrf.mxu0
        %550 = vmatprep.mubr.f32.mxu0 0.0
        %551 = vmatmul.mubr.f32.gmra.mxu0 %v369
        %v552 = vpop.f32.mrf.mxu0
        %v553 = vadd.f32 %v338, %v552
        %v554 = vpop.f32.mrf.mxu0
        %555 = vmatprep.mubr.f32.mxu0 0.0
        %556 = vmatmul.mubr.f32.gmra.mxu0 %v372
        %v557 = vpop.f32.mrf.mxu0
        %v558 = vadd.f32 %v338, %v557
        %v559 = vpop.f32.mrf.mxu0
        %560 = vmatprep.mubr.f32.mxu0 0.0
        %561 = vmatmul.mubr.f32.gmra.mxu0 %v375
        %v562 = vpop.f32.mrf.mxu0
        %v563 = vadd.f32 %v338, %v562
        %v564 = vpop.f32.mrf.mxu0
        %565 = vmatprep.mubr.f32.mxu0 0.0
        %566 = vmatmul.mubr.f32.gmra.mxu0 %v378
        %v567 = vpop.f32.mrf.mxu0
        %v568 = vadd.f32 %v338, %v567
        %v569 = vpop.f32.mrf.mxu0
        %570 = vmatprep.mubr.f32.mxu0 0.0
        %571 = vmatmul.mubr.f32.gmra.mxu0 %v381
        %v572 = vpop.f32.mrf.mxu0
        %v573 = vadd.f32 %v338, %v572
        %v574 = vpop.f32.mrf.mxu0
        %575 = vmatprep.mubr.f32.mxu0 0.0
        %576 = vmatmul.mubr.f32.gmra.mxu0 %v384
        %v577 = vpop.f32.mrf.mxu0
        %v578 = vadd.f32 %v338, %v577
        %v579 = vpop.f32.mrf.mxu0
        %580 = vmatprep.mubr.f32.mxu0 0.0
        %581 = vmatmul.mubr.f32.gmra.mxu0 %v387
        %v582 = vpop.f32.mrf.mxu0
        %v583 = vadd.f32 %v338, %v582
        %v584 = vpop.f32.mrf.mxu0
        %585 = vmatprep.mubr.f32.mxu0 0.0
        %586 = vmatmul.mubr.f32.gmra.mxu0 %v390
        %v587 = vpop.f32.mrf.mxu0
        %v588 = vadd.f32 %v338, %v587
        %v589 = vpop.f32.mrf.mxu0
        %590 = vmatprep.mubr.f32.mxu0 0.0
        %591 = vmatmul.mubr.f32.gmra.mxu0 %v393
        %v592 = vpop.f32.mrf.mxu0
        %v593 = vadd.f32 %v338, %v592
        %v594 = vpop.f32.mrf.mxu0
        %595 = vmatprep.mubr.f32.mxu0 0.0
        %596 = vmatmul.mubr.f32.gmra.mxu0 %v396
        %v597 = vpop.f32.mrf.mxu0
        %v598 = vadd.f32 %v338, %v597
        %v599 = vpop.f32.mrf.mxu0
        %600 = vmatprep.mubr.f32.mxu0 0.0
        %601 = vmatmul.mubr.f32.gmra.mxu0 %v399
        %v602 = vpop.f32.mrf.mxu0
        %v603 = vadd.f32 %v338, %v602
        %v604 = vpop.f32.mrf.mxu0
        %605 = vmatprep.mubr.f32.mxu0 0.0
        %606 = vmatmul.mubr.f32.gmra.mxu0 %v402
        %v607 = vpop.f32.mrf.mxu0
        %v608 = vadd.f32 %v338, %v607
        %v609 = vpop.f32.mrf.mxu0
        %610 = vmatprep.mubr.f32.mxu0 0.0
        %611 = vmatmul.mubr.f32.gmra.mxu0 %v405
        %v612 = vpop.f32.mrf.mxu0
        %v613 = vadd.f32 %v338, %v612
        %v614 = vpop.f32.mrf.mxu0
        %615 = vmatprep.mubr.f32.mxu0 0.0
        %616 = vmatmul.mubr.f32.gmra.mxu0 %v408
        %v617 = vpop.f32.mrf.mxu0
        %v618 = vadd.f32 %v338, %v617
        %v619 = vpop.f32.mrf.mxu0
        %620 = vmatprep.mubr.f32.mxu0 0.0
        %621 = vmatmul.mubr.f32.gmra.mxu0 %v411
        %v622 = vpop.f32.mrf.mxu0
        %v623 = vadd.f32 %v338, %v622
        %v624 = vpop.f32.mrf.mxu0
        %625 = vmatprep.mubr.f32.mxu0 0.0
        %626 = vmatmul.mubr.f32.gmra.mxu0 %v414
        %v627 = vpop.f32.mrf.mxu0
        %v628 = vadd.f32 %v338, %v627
        %v629 = vpop.f32.mrf.mxu0
        %630 = vmatprep.mubr.f32.mxu0 0.0
        %631 = vmatmul.mubr.f32.gmra.mxu0 %v417
        %v632 = vpop.f32.mrf.mxu0
        %v633 = vadd.f32 %v338, %v632
        %v634 = vpop.f32.mrf.mxu0
        %635 = vmatprep.mubr.f32.mxu0 0.0
        %636 = vmatmul.mubr.f32.gmra.mxu0 %v420
        %v637 = vpop.f32.mrf.mxu0
        %v638 = vadd.f32 %v338, %v637
        %v639 = vpop.f32.mrf.mxu0
        %640 = vmatprep.mubr.f32.mxu0 0.0
        %641 = vmatmul.mubr.f32.gmra.mxu0 %v423
        %v642 = vpop.f32.mrf.mxu0
        %v643 = vadd.f32 %v338, %v642
        %v644 = vpop.f32.mrf.mxu0
        %645 = vmatprep.mubr.f32.mxu0 0.0
        %646 = vmatmul.mubr.f32.gmra.mxu0 %v426
        %v647 = vpop.f32.mrf.mxu0
        %v648 = vadd.f32 %v338, %v647
        %v649 = vpop.f32.mrf.mxu0
        %650 = vmatprep.mubr.f32.mxu0 0.0
        %651 = vmatmul.mubr.f32.gmra.mxu0 %v429
        %v652 = vpop.f32.mrf.mxu0
        %v653 = vadd.f32 %v338, %v652
        %v654 = vpop.f32.mrf.mxu0
        %655 = vmatprep.mubr.f32.mxu0 0.0
        %656 = vmatmul.mubr.f32.gmra.mxu0 %v432
        %v657 = vpop.f32.mrf.mxu0
        %v658 = vadd.f32 %v338, %v657
        %v659 = vpop.f32.mrf.mxu0
        %660 = vmatprep.mubr.f32.mxu0 0.0
        %661 = vmatmul.mubr.f32.gmra.mxu0 %v435
        %v662 = vpop.f32.mrf.mxu0
        %v663 = vadd.f32 %v338, %v662
        %v664 = vpop.f32.mrf.mxu0
        %665 = vdwg.mxu0
        %v666 = vmax.f32 %v508, 0.0
        %v667 = vmax.f32 %v513, 0.0
        %v668 = vmax.f32 %v518, 0.0
        %v669 = vmax.f32 %v523, 0.0
        %v670 = vmax.f32 %v528, 0.0
        %v671 = vmax.f32 %v533, 0.0
        %v672 = vmax.f32 %v538, 0.0
        %v673 = vmax.f32 %v543, 0.0
        %v674 = vmax.f32 %v548, 0.0
        %v675 = vmax.f32 %v553, 0.0
        %v676 = vmax.f32 %v558, 0.0
        %v677 = vmax.f32 %v563, 0.0
        %v678 = vmax.f32 %v568, 0.0
        %v679 = vmax.f32 %v573, 0.0
        %v680 = vmax.f32 %v578, 0.0
        %v681 = vmax.f32 %v583, 0.0
        %v682 = vmax.f32 %v588, 0.0
        %v683 = vmax.f32 %v593, 0.0
        %v684 = vmax.f32 %v598, 0.0
        %v685 = vmax.f32 %v603, 0.0
        %v686 = vmax.f32 %v608, 0.0
        %v687 = vmax.f32 %v613, 0.0
        %v688 = vmax.f32 %v618, 0.0
        %v689 = vmax.f32 %v623, 0.0
        %v690 = vmax.f32 %v628, 0.0
        %v691 = vmax.f32 %v633, 0.0
        %v692 = vmax.f32 %v638, 0.0
        %v693 = vmax.f32 %v643, 0.0
        %v694 = vmax.f32 %v648, 0.0
        %v695 = vmax.f32 %v653, 0.0
        %v696 = vmax.f32 %v658, 0.0
        %v697 = vmax.f32 %v663, 0.0
        %v698 = vld [vmem:[%s3] sm:$0xff]
        %v699 = vld [vmem:[%s3 + $0x8] sm:$0xff]
        %v700 = vld [vmem:[%s3 + $0x10] sm:$0xff]
        %v701 = vld [vmem:[%s3 + $0x18] sm:$0xff]
        %v702 = vld [vmem:[%s3 + $0x20] sm:$0xff]
        %v703 = vld [vmem:[%s3 + $0x28] sm:$0xff]
        %v704 = vld [vmem:[%s3 + $0x30] sm:$0xff]
        %v705 = vld [vmem:[%s3 + $0x38] sm:$0xff]
        %v706 = vld [vmem:[%s4] sm:$0x1]
        %v708 = vlaneseq
        %v709 = vshrl.u32 %v708, 7
        %v710 = vsub.s32 0, %v709
        %v711 = vrot.slane %v706, %v710
        %vm713 = vcmask 523264
        %v715 = vsel %vm713, %v666, 0
        %v718 = vsel %vm713, %v667, 0
        %v721 = vsel %vm713, %v668, 0
        %v724 = vsel %vm713, %v669, 0
        %v727 = vsel %vm713, %v670, 0
        %v730 = vsel %vm713, %v671, 0
        %v733 = vsel %vm713, %v672, 0
        %v736 = vsel %vm713, %v673, 0
        %v739 = vsel %vm713, %v674, 0
        %v742 = vsel %vm713, %v675, 0
        %v745 = vsel %vm713, %v676, 0
        %v748 = vsel %vm713, %v677, 0
        %v751 = vsel %vm713, %v678, 0
        %v754 = vsel %vm713, %v679, 0
        %v757 = vsel %vm713, %v680, 0
        %v760 = vsel %vm713, %v681, 0
        %v763 = vsel %vm713, %v682, 0
        %v766 = vsel %vm713, %v683, 0
        %v769 = vsel %vm713, %v684, 0
        %v772 = vsel %vm713, %v685, 0
        %v775 = vsel %vm713, %v686, 0
        %v778 = vsel %vm713, %v687, 0
        %v781 = vsel %vm713, %v688, 0
        %v784 = vsel %vm713, %v689, 0
        %v787 = vsel %vm713, %v690, 0
        %v790 = vsel %vm713, %v691, 0
        %v793 = vsel %vm713, %v692, 0
        %v796 = vsel %vm713, %v693, 0
        %v799 = vsel %vm713, %v694, 0
        %v802 = vsel %vm713, %v695, 0
        %v805 = vsel %vm713, %v696, 0
        %v808 = vsel %vm713, %v697, 0
        %810 = vmatprep.subr.mxu0 0.0
        %811 = vmatpush1.msra.mxu0 0.0
        %812 = vmatprep.subr.mxu0 0.0
        %813 = vmatpush1.msra.mxu0 0.0
        %814 = vmatprep.subr.mxu0 0.0
        %815 = vmatpush1.msra.mxu0 0.0
        %816 = vmatprep.subr.mxu0 0.0
        %817 = vmatpush1.msra.mxu0 0.0
        %818 = vmatprep.subr.mxu0 0.0
        %819 = vmatpush1.msra.mxu0 0.0
        %820 = vmatprep.subr.mxu0 0.0
        %821 = vmatpush1.msra.mxu0 0.0
        %822 = vmatprep.subr.mxu0 0.0
        %823 = vmatpush1.msra.mxu0 0.0
        %824 = vmatprep.subr.mxu0 0.0
        %825 = vmatpush1.msra.mxu0 0.0
        %826 = vmatprep.subr.mxu0 0.0
        %827 = vmatpush1.msra.mxu0 %v705
        %828 = vmatprep.subr.mxu0 0.0
        %829 = vmatpush1.msra.mxu0 %v704
        %830 = vmatprep.subr.mxu0 0.0
        %831 = vmatpush1.msra.mxu0 %v703
        %832 = vmatprep.subr.mxu0 0.0
        %833 = vmatpush1.msra.mxu0 %v702
        %834 = vmatprep.subr.mxu0 0.0
        %835 = vmatpush1.msra.mxu0 %v701
        %836 = vmatprep.subr.mxu0 0.0
        %837 = vmatpush1.msra.mxu0 %v700
        %838 = vmatprep.subr.mxu0 0.0
        %839 = vmatpush1.msra.mxu0 %v699
        %840 = vmatprep.subr.mxu0 0.0
        %841 = vmatpush1.msra.mxu0 %v698
        %842 = vmatprep.subr.mxu0 0.0
        %843 = vmatpush2.msra.mxu0 0.0
        %844 = vmatprep.subr.mxu0 0.0
        %845 = vmatpush2.msra.mxu0 0.0
        %846 = vmatprep.subr.mxu0 0.0
        %847 = vmatpush2.msra.mxu0 0.0
        %848 = vmatprep.subr.mxu0 0.0
        %849 = vmatpush2.msra.mxu0 0.0
        %850 = vmatprep.subr.mxu0 0.0
        %851 = vmatpush2.msra.mxu0 0.0
        %852 = vmatprep.subr.mxu0 0.0
        %853 = vmatpush2.msra.mxu0 0.0
        %854 = vmatprep.subr.mxu0 0.0
        %855 = vmatpush2.msra.mxu0 0.0
        %856 = vmatprep.subr.mxu0 0.0
        %857 = vmatpush2.msra.mxu0 0.0
        %858 = vmatprep.subr.mxu0 0.0
        %859 = vmatpush2.msra.mxu0 0.0
        %860 = vmatprep.subr.mxu0 0.0
        %861 = vmatpush2.msra.mxu0 0.0
        %862 = vmatprep.subr.mxu0 0.0
        %863 = vmatpush2.msra.mxu0 0.0
        %864 = vmatprep.subr.mxu0 0.0
        %865 = vmatpush2.msra.mxu0 0.0
        %866 = vmatprep.subr.mxu0 0.0
        %867 = vmatpush2.msra.mxu0 0.0
        %868 = vmatprep.subr.mxu0 0.0
        %869 = vmatpush2.msra.mxu0 0.0
        %870 = vmatprep.subr.mxu0 0.0
        %871 = vmatpush2.msra.mxu0 0.0
        %872 = vmatprep.subr.mxu0 0.0
        %873 = vmatpush2.msra.mxu0 0.0
        %874 = vmatprep.mubr.f32.mxu0 0.0
        %875 = vmatmul.mubr.f32.gmra.mxu0 %v715
        %v876 = vpop.f32.mrf.mxu0
        %v877 = vadd.f32 %v711, %v876
        %v878 = vpop.f32.mrf.mxu0
        %879 = vmatprep.mubr.f32.mxu0 0.0
        %880 = vmatmul.mubr.f32.gmra.mxu0 %v718
        %v881 = vpop.f32.mrf.mxu0
        %v882 = vadd.f32 %v711, %v881
        %v883 = vpop.f32.mrf.mxu0
        %884 = vmatprep.mubr.f32.mxu0 0.0
        %885 = vmatmul.mubr.f32.gmra.mxu0 %v721
        %v886 = vpop.f32.mrf.mxu0
        %v887 = vadd.f32 %v711, %v886
        %v888 = vpop.f32.mrf.mxu0
        %889 = vmatprep.mubr.f32.mxu0 0.0
        %890 = vmatmul.mubr.f32.gmra.mxu0 %v724
        %v891 = vpop.f32.mrf.mxu0
        %v892 = vadd.f32 %v711, %v891
        %v893 = vpop.f32.mrf.mxu0
        %894 = vmatprep.mubr.f32.mxu0 0.0
        %895 = vmatmul.mubr.f32.gmra.mxu0 %v727
        %v896 = vpop.f32.mrf.mxu0
        %v897 = vadd.f32 %v711, %v896
        %v898 = vpop.f32.mrf.mxu0
        %899 = vmatprep.mubr.f32.mxu0 0.0
        %900 = vmatmul.mubr.f32.gmra.mxu0 %v730
        %v901 = vpop.f32.mrf.mxu0
        %v902 = vadd.f32 %v711, %v901
        %v903 = vpop.f32.mrf.mxu0
        %904 = vmatprep.mubr.f32.mxu0 0.0
        %905 = vmatmul.mubr.f32.gmra.mxu0 %v733
        %v906 = vpop.f32.mrf.mxu0
        %v907 = vadd.f32 %v711, %v906
        %v908 = vpop.f32.mrf.mxu0
        %909 = vmatprep.mubr.f32.mxu0 0.0
        %910 = vmatmul.mubr.f32.gmra.mxu0 %v736
        %v911 = vpop.f32.mrf.mxu0
        %v912 = vadd.f32 %v711, %v911
        %v913 = vpop.f32.mrf.mxu0
        %914 = vmatprep.mubr.f32.mxu0 0.0
        %915 = vmatmul.mubr.f32.gmra.mxu0 %v739
        %v916 = vpop.f32.mrf.mxu0
        %v917 = vadd.f32 %v711, %v916
        %v918 = vpop.f32.mrf.mxu0
        %919 = vmatprep.mubr.f32.mxu0 0.0
        %920 = vmatmul.mubr.f32.gmra.mxu0 %v742
        %v921 = vpop.f32.mrf.mxu0
        %v922 = vadd.f32 %v711, %v921
        %v923 = vpop.f32.mrf.mxu0
        %924 = vmatprep.mubr.f32.mxu0 0.0
        %925 = vmatmul.mubr.f32.gmra.mxu0 %v745
        %v926 = vpop.f32.mrf.mxu0
        %v927 = vadd.f32 %v711, %v926
        %v928 = vpop.f32.mrf.mxu0
        %929 = vmatprep.mubr.f32.mxu0 0.0
        %930 = vmatmul.mubr.f32.gmra.mxu0 %v748
        %v931 = vpop.f32.mrf.mxu0
        %v932 = vadd.f32 %v711, %v931
        %v933 = vpop.f32.mrf.mxu0
        %934 = vmatprep.mubr.f32.mxu0 0.0
        %935 = vmatmul.mubr.f32.gmra.mxu0 %v751
        %v936 = vpop.f32.mrf.mxu0
        %v937 = vadd.f32 %v711, %v936
        %v938 = vpop.f32.mrf.mxu0
        %939 = vmatprep.mubr.f32.mxu0 0.0
        %940 = vmatmul.mubr.f32.gmra.mxu0 %v754
        %v941 = vpop.f32.mrf.mxu0
        %v942 = vadd.f32 %v711, %v941
        %v943 = vpop.f32.mrf.mxu0
        %944 = vmatprep.mubr.f32.mxu0 0.0
        %945 = vmatmul.mubr.f32.gmra.mxu0 %v757
        %v946 = vpop.f32.mrf.mxu0
        %v947 = vadd.f32 %v711, %v946
        %v948 = vpop.f32.mrf.mxu0
        %949 = vmatprep.mubr.f32.mxu0 0.0
        %950 = vmatmul.mubr.f32.gmra.mxu0 %v760
        %v951 = vpop.f32.mrf.mxu0
        %v952 = vadd.f32 %v711, %v951
        %v953 = vpop.f32.mrf.mxu0
        %954 = vmatprep.mubr.f32.mxu0 0.0
        %955 = vmatmul.mubr.f32.gmra.mxu0 %v763
        %v956 = vpop.f32.mrf.mxu0
        %v957 = vadd.f32 %v711, %v956
        %v958 = vpop.f32.mrf.mxu0
        %959 = vmatprep.mubr.f32.mxu0 0.0
        %960 = vmatmul.mubr.f32.gmra.mxu0 %v766
        %v961 = vpop.f32.mrf.mxu0
        %v962 = vadd.f32 %v711, %v961
        %v963 = vpop.f32.mrf.mxu0
        %964 = vmatprep.mubr.f32.mxu0 0.0
        %965 = vmatmul.mubr.f32.gmra.mxu0 %v769
        %v966 = vpop.f32.mrf.mxu0
        %v967 = vadd.f32 %v711, %v966
        %v968 = vpop.f32.mrf.mxu0
        %969 = vmatprep.mubr.f32.mxu0 0.0
        %970 = vmatmul.mubr.f32.gmra.mxu0 %v772
        %v971 = vpop.f32.mrf.mxu0
        %v972 = vadd.f32 %v711, %v971
        %v973 = vpop.f32.mrf.mxu0
        %974 = vmatprep.mubr.f32.mxu0 0.0
        %975 = vmatmul.mubr.f32.gmra.mxu0 %v775
        %v976 = vpop.f32.mrf.mxu0
        %v977 = vadd.f32 %v711, %v976
        %v978 = vpop.f32.mrf.mxu0
        %979 = vmatprep.mubr.f32.mxu0 0.0
        %980 = vmatmul.mubr.f32.gmra.mxu0 %v778
        %v981 = vpop.f32.mrf.mxu0
        %v982 = vadd.f32 %v711, %v981
        %v983 = vpop.f32.mrf.mxu0
        %984 = vmatprep.mubr.f32.mxu0 0.0
        %985 = vmatmul.mubr.f32.gmra.mxu0 %v781
        %v986 = vpop.f32.mrf.mxu0
        %v987 = vadd.f32 %v711, %v986
        %v988 = vpop.f32.mrf.mxu0
        %989 = vmatprep.mubr.f32.mxu0 0.0
        %990 = vmatmul.mubr.f32.gmra.mxu0 %v784
        %v991 = vpop.f32.mrf.mxu0
        %v992 = vadd.f32 %v711, %v991
        %v993 = vpop.f32.mrf.mxu0
        %994 = vmatprep.mubr.f32.mxu0 0.0
        %995 = vmatmul.mubr.f32.gmra.mxu0 %v787
        %v996 = vpop.f32.mrf.mxu0
        %v997 = vadd.f32 %v711, %v996
        %v998 = vpop.f32.mrf.mxu0
        %999 = vmatprep.mubr.f32.mxu0 0.0
        %1000 = vmatmul.mubr.f32.gmra.mxu0 %v790
        %v1001 = vpop.f32.mrf.mxu0
        %v1002 = vadd.f32 %v711, %v1001
        %v1003 = vpop.f32.mrf.mxu0
        %1004 = vmatprep.mubr.f32.mxu0 0.0
        %1005 = vmatmul.mubr.f32.gmra.mxu0 %v793
        %v1006 = vpop.f32.mrf.mxu0
        %v1007 = vadd.f32 %v711, %v1006
        %v1008 = vpop.f32.mrf.mxu0
        %1009 = vmatprep.mubr.f32.mxu0 0.0
        %1010 = vmatmul.mubr.f32.gmra.mxu0 %v796
        %v1011 = vpop.f32.mrf.mxu0
        %v1012 = vadd.f32 %v711, %v1011
        %v1013 = vpop.f32.mrf.mxu0
        %1014 = vmatprep.mubr.f32.mxu0 0.0
        %1015 = vmatmul.mubr.f32.gmra.mxu0 %v799
        %v1016 = vpop.f32.mrf.mxu0
        %v1017 = vadd.f32 %v711, %v1016
        %v1018 = vpop.f32.mrf.mxu0
        %1019 = vmatprep.mubr.f32.mxu0 0.0
        %1020 = vmatmul.mubr.f32.gmra.mxu0 %v802
        %v1021 = vpop.f32.mrf.mxu0
        %v1022 = vadd.f32 %v711, %v1021
        %v1023 = vpop.f32.mrf.mxu0
        %1024 = vmatprep.mubr.f32.mxu0 0.0
        %1025 = vmatmul.mubr.f32.gmra.mxu0 %v805
        %v1026 = vpop.f32.mrf.mxu0
        %v1027 = vadd.f32 %v711, %v1026
        %v1028 = vpop.f32.mrf.mxu0
        %1029 = vmatprep.mubr.f32.mxu0 0.0
        %1030 = vmatmul.mubr.f32.gmra.mxu0 %v808
        %v1031 = vpop.f32.mrf.mxu0
        %v1032 = vadd.f32 %v711, %v1031
        %v1033 = vpop.f32.mrf.mxu0
        %1034 = vdwg.mxu0
        %v1035 = vmax.f32 %v877, 0.0
        %v1036 = vmax.f32 %v882, 0.0
        %v1037 = vmax.f32 %v887, 0.0
        %v1038 = vmax.f32 %v892, 0.0
        %v1039 = vmax.f32 %v897, 0.0
        %v1040 = vmax.f32 %v902, 0.0
        %v1041 = vmax.f32 %v907, 0.0
        %v1042 = vmax.f32 %v912, 0.0
        %v1043 = vmax.f32 %v917, 0.0
        %v1044 = vmax.f32 %v922, 0.0
        %v1045 = vmax.f32 %v927, 0.0
        %v1046 = vmax.f32 %v932, 0.0
        %v1047 = vmax.f32 %v937, 0.0
        %v1048 = vmax.f32 %v942, 0.0
        %v1049 = vmax.f32 %v947, 0.0
        %v1050 = vmax.f32 %v952, 0.0
        %v1051 = vmax.f32 %v957, 0.0
        %v1052 = vmax.f32 %v962, 0.0
        %v1053 = vmax.f32 %v967, 0.0
        %v1054 = vmax.f32 %v972, 0.0
        %v1055 = vmax.f32 %v977, 0.0
        %v1056 = vmax.f32 %v982, 0.0
        %v1057 = vmax.f32 %v987, 0.0
        %v1058 = vmax.f32 %v992, 0.0
        %v1059 = vmax.f32 %v997, 0.0
        %v1060 = vmax.f32 %v1002, 0.0
        %v1061 = vmax.f32 %v1007, 0.0
        %v1062 = vmax.f32 %v1012, 0.0
        %v1063 = vmax.f32 %v1017, 0.0
        %v1064 = vmax.f32 %v1022, 0.0
        %v1065 = vmax.f32 %v1027, 0.0
        %v1066 = vmax.f32 %v1032, 0.0
        %v1067 = vld [vmem:[%s5] sm:$0xff]
        %v1068 = vld [vmem:[%s5 + $0x8] sm:$0xff]
        %v1069 = vld [vmem:[%s5 + $0x10] sm:$0xff]
        %v1070 = vld [vmem:[%s5 + $0x18] sm:$0xff]
        %v1071 = vld [vmem:[%s6] sm:$0x1]
        %v1073 = vlaneseq
        %v1074 = vshrl.u32 %v1073, 7
        %v1075 = vsub.s32 0, %v1074
        %v1076 = vrot.slane %v1071, %v1075
        %vm1078 = vcmask 261120
        %v1080 = vsel %vm1078, %v1035, 0
        %v1083 = vsel %vm1078, %v1036, 0
        %v1086 = vsel %vm1078, %v1037, 0
        %v1089 = vsel %vm1078, %v1038, 0
        %v1092 = vsel %vm1078, %v1039, 0
        %v1095 = vsel %vm1078, %v1040, 0
        %v1098 = vsel %vm1078, %v1041, 0
        %v1101 = vsel %vm1078, %v1042, 0
        %v1104 = vsel %vm1078, %v1043, 0
        %v1107 = vsel %vm1078, %v1044, 0
        %v1110 = vsel %vm1078, %v1045, 0
        %v1113 = vsel %vm1078, %v1046, 0
        %v1116 = vsel %vm1078, %v1047, 0
        %v1119 = vsel %vm1078, %v1048, 0
        %v1122 = vsel %vm1078, %v1049, 0
        %v1125 = vsel %vm1078, %v1050, 0
        %v1128 = vsel %vm1078, %v1051, 0
        %v1131 = vsel %vm1078, %v1052, 0
        %v1134 = vsel %vm1078, %v1053, 0
        %v1137 = vsel %vm1078, %v1054, 0
        %v1140 = vsel %vm1078, %v1055, 0
        %v1143 = vsel %vm1078, %v1056, 0
        %v1146 = vsel %vm1078, %v1057, 0
        %v1149 = vsel %vm1078, %v1058, 0
        %v1152 = vsel %vm1078, %v1059, 0
        %v1155 = vsel %vm1078, %v1060, 0
        %v1158 = vsel %vm1078, %v1061, 0
        %v1161 = vsel %vm1078, %v1062, 0
        %v1164 = vsel %vm1078, %v1063, 0
        %v1167 = vsel %vm1078, %v1064, 0
        %v1170 = vsel %vm1078, %v1065, 0
        %v1173 = vsel %vm1078, %v1066, 0
        %1175 = vmatprep.subr.mxu0 0.0
        %1176 = vmatpush1.msra.mxu0 0.0
        %1177 = vmatprep.subr.mxu0 0.0
        %1178 = vmatpush1.msra.mxu0 0.0
        %1179 = vmatprep.subr.mxu0 0.0
        %1180 = vmatpush1.msra.mxu0 0.0
        %1181 = vmatprep.subr.mxu0 0.0
        %1182 = vmatpush1.msra.mxu0 0.0
        %1183 = vmatprep.subr.mxu0 0.0
        %1184 = vmatpush1.msra.mxu0 0.0
        %1185 = vmatprep.subr.mxu0 0.0
        %1186 = vmatpush1.msra.mxu0 0.0
        %1187 = vmatprep.subr.mxu0 0.0
        %1188 = vmatpush1.msra.mxu0 0.0
        %1189 = vmatprep.subr.mxu0 0.0
        %1190 = vmatpush1.msra.mxu0 0.0
        %1191 = vmatprep.subr.mxu0 0.0
        %1192 = vmatpush1.msra.mxu0 0.0
        %1193 = vmatprep.subr.mxu0 0.0
        %1194 = vmatpush1.msra.mxu0 0.0
        %1195 = vmatprep.subr.mxu0 0.0
        %1196 = vmatpush1.msra.mxu0 0.0
        %1197 = vmatprep.subr.mxu0 0.0
        %1198 = vmatpush1.msra.mxu0 0.0
        %1199 = vmatprep.subr.mxu0 0.0
        %1200 = vmatpush1.msra.mxu0 %v1070
        %1201 = vmatprep.subr.mxu0 0.0
        %1202 = vmatpush1.msra.mxu0 %v1069
        %1203 = vmatprep.subr.mxu0 0.0
        %1204 = vmatpush1.msra.mxu0 %v1068
        %1205 = vmatprep.subr.mxu0 0.0
        %1206 = vmatpush1.msra.mxu0 %v1067
        %1207 = vmatprep.subr.mxu0 0.0
        %1208 = vmatpush2.msra.mxu0 0.0
        %1209 = vmatprep.subr.mxu0 0.0
        %1210 = vmatpush2.msra.mxu0 0.0
        %1211 = vmatprep.subr.mxu0 0.0
        %1212 = vmatpush2.msra.mxu0 0.0
        %1213 = vmatprep.subr.mxu0 0.0
        %1214 = vmatpush2.msra.mxu0 0.0
        %1215 = vmatprep.subr.mxu0 0.0
        %1216 = vmatpush2.msra.mxu0 0.0
        %1217 = vmatprep.subr.mxu0 0.0
        %1218 = vmatpush2.msra.mxu0 0.0
        %1219 = vmatprep.subr.mxu0 0.0
        %1220 = vmatpush2.msra.mxu0 0.0
        %1221 = vmatprep.subr.mxu0 0.0
        %1222 = vmatpush2.msra.mxu0 0.0
        %1223 = vmatprep.subr.mxu0 0.0
        %1224 = vmatpush2.msra.mxu0 0.0
        %1225 = vmatprep.subr.mxu0 0.0
        %1226 = vmatpush2.msra.mxu0 0.0
        %1227 = vmatprep.subr.mxu0 0.0
        %1228 = vmatpush2.msra.mxu0 0.0
        %1229 = vmatprep.subr.mxu0 0.0
        %1230 = vmatpush2.msra.mxu0 0.0
        %1231 = vmatprep.subr.mxu0 0.0
        %1232 = vmatpush2.msra.mxu0 0.0
        %1233 = vmatprep.subr.mxu0 0.0
        %1234 = vmatpush2.msra.mxu0 0.0
        %1235 = vmatprep.subr.mxu0 0.0
        %1236 = vmatpush2.msra.mxu0 0.0
        %1237 = vmatprep.subr.mxu0 0.0
        %1238 = vmatpush2.msra.mxu0 0.0
        %1239 = vmatprep.mubr.f32.mxu0 0.0
        %1240 = vmatmul.mubr.f32.gmra.mxu0 %v1080
        %v1241 = vpop.f32.mrf.mxu0
        %v1242 = vadd.f32 %v1076, %v1241
        %v1243 = vpop.f32.mrf.mxu0
        %1244 = vmatprep.mubr.f32.mxu0 0.0
        %1245 = vmatmul.mubr.f32.gmra.mxu0 %v1083
        %v1246 = vpop.f32.mrf.mxu0
        %v1247 = vadd.f32 %v1076, %v1246
        %v1248 = vpop.f32.mrf.mxu0
        %1249 = vmatprep.mubr.f32.mxu0 0.0
        %1250 = vmatmul.mubr.f32.gmra.mxu0 %v1086
        %v1251 = vpop.f32.mrf.mxu0
        %v1252 = vadd.f32 %v1076, %v1251
        %v1253 = vpop.f32.mrf.mxu0
        %1254 = vmatprep.mubr.f32.mxu0 0.0
        %1255 = vmatmul.mubr.f32.gmra.mxu0 %v1089
        %v1256 = vpop.f32.mrf.mxu0
        %v1257 = vadd.f32 %v1076, %v1256
        %v1258 = vpop.f32.mrf.mxu0
        %1259 = vmatprep.mubr.f32.mxu0 0.0
        %1260 = vmatmul.mubr.f32.gmra.mxu0 %v1092
        %v1261 = vpop.f32.mrf.mxu0
        %v1262 = vadd.f32 %v1076, %v1261
        %v1263 = vpop.f32.mrf.mxu0
        %1264 = vmatprep.mubr.f32.mxu0 0.0
        %1265 = vmatmul.mubr.f32.gmra.mxu0 %v1095
        %v1266 = vpop.f32.mrf.mxu0
        %v1267 = vadd.f32 %v1076, %v1266
        %v1268 = vpop.f32.mrf.mxu0
        %1269 = vmatprep.mubr.f32.mxu0 0.0
        %1270 = vmatmul.mubr.f32.gmra.mxu0 %v1098
        %v1271 = vpop.f32.mrf.mxu0
        %v1272 = vadd.f32 %v1076, %v1271
        %v1273 = vpop.f32.mrf.mxu0
        %1274 = vmatprep.mubr.f32.mxu0 0.0
        %1275 = vmatmul.mubr.f32.gmra.mxu0 %v1101
        %v1276 = vpop.f32.mrf.mxu0
        %v1277 = vadd.f32 %v1076, %v1276
        %v1278 = vpop.f32.mrf.mxu0
        %1279 = vmatprep.mubr.f32.mxu0 0.0
        %1280 = vmatmul.mubr.f32.gmra.mxu0 %v1104
        %v1281 = vpop.f32.mrf.mxu0
        %v1282 = vadd.f32 %v1076, %v1281
        %v1283 = vpop.f32.mrf.mxu0
        %1284 = vmatprep.mubr.f32.mxu0 0.0
        %1285 = vmatmul.mubr.f32.gmra.mxu0 %v1107
        %v1286 = vpop.f32.mrf.mxu0
        %v1287 = vadd.f32 %v1076, %v1286
        %v1288 = vpop.f32.mrf.mxu0
        %1289 = vmatprep.mubr.f32.mxu0 0.0
        %1290 = vmatmul.mubr.f32.gmra.mxu0 %v1110
        %v1291 = vpop.f32.mrf.mxu0
        %v1292 = vadd.f32 %v1076, %v1291
        %v1293 = vpop.f32.mrf.mxu0
        %1294 = vmatprep.mubr.f32.mxu0 0.0
        %1295 = vmatmul.mubr.f32.gmra.mxu0 %v1113
        %v1296 = vpop.f32.mrf.mxu0
        %v1297 = vadd.f32 %v1076, %v1296
        %v1298 = vpop.f32.mrf.mxu0
        %1299 = vmatprep.mubr.f32.mxu0 0.0
        %1300 = vmatmul.mubr.f32.gmra.mxu0 %v1116
        %v1301 = vpop.f32.mrf.mxu0
        %v1302 = vadd.f32 %v1076, %v1301
        %v1303 = vpop.f32.mrf.mxu0
        %1304 = vmatprep.mubr.f32.mxu0 0.0
        %1305 = vmatmul.mubr.f32.gmra.mxu0 %v1119
        %v1306 = vpop.f32.mrf.mxu0
        %v1307 = vadd.f32 %v1076, %v1306
        %v1308 = vpop.f32.mrf.mxu0
        %1309 = vmatprep.mubr.f32.mxu0 0.0
        %1310 = vmatmul.mubr.f32.gmra.mxu0 %v1122
        %v1311 = vpop.f32.mrf.mxu0
        %v1312 = vadd.f32 %v1076, %v1311
        %v1313 = vpop.f32.mrf.mxu0
        %1314 = vmatprep.mubr.f32.mxu0 0.0
        %1315 = vmatmul.mubr.f32.gmra.mxu0 %v1125
        %v1316 = vpop.f32.mrf.mxu0
        %v1317 = vadd.f32 %v1076, %v1316
        %v1318 = vpop.f32.mrf.mxu0
        %1319 = vmatprep.mubr.f32.mxu0 0.0
        %1320 = vmatmul.mubr.f32.gmra.mxu0 %v1128
        %v1321 = vpop.f32.mrf.mxu0
        %v1322 = vadd.f32 %v1076, %v1321
        %v1323 = vpop.f32.mrf.mxu0
        %1324 = vmatprep.mubr.f32.mxu0 0.0
        %1325 = vmatmul.mubr.f32.gmra.mxu0 %v1131
        %v1326 = vpop.f32.mrf.mxu0
        %v1327 = vadd.f32 %v1076, %v1326
        %v1328 = vpop.f32.mrf.mxu0
        %1329 = vmatprep.mubr.f32.mxu0 0.0
        %1330 = vmatmul.mubr.f32.gmra.mxu0 %v1134
        %v1331 = vpop.f32.mrf.mxu0
        %v1332 = vadd.f32 %v1076, %v1331
        %v1333 = vpop.f32.mrf.mxu0
        %1334 = vmatprep.mubr.f32.mxu0 0.0
        %1335 = vmatmul.mubr.f32.gmra.mxu0 %v1137
        %v1336 = vpop.f32.mrf.mxu0
        %v1337 = vadd.f32 %v1076, %v1336
        %v1338 = vpop.f32.mrf.mxu0
        %1339 = vmatprep.mubr.f32.mxu0 0.0
        %1340 = vmatmul.mubr.f32.gmra.mxu0 %v1140
        %v1341 = vpop.f32.mrf.mxu0
        %v1342 = vadd.f32 %v1076, %v1341
        %v1343 = vpop.f32.mrf.mxu0
        %1344 = vmatprep.mubr.f32.mxu0 0.0
        %1345 = vmatmul.mubr.f32.gmra.mxu0 %v1143
        %v1346 = vpop.f32.mrf.mxu0
        %v1347 = vadd.f32 %v1076, %v1346
        %v1348 = vpop.f32.mrf.mxu0
        %1349 = vmatprep.mubr.f32.mxu0 0.0
        %1350 = vmatmul.mubr.f32.gmra.mxu0 %v1146
        %v1351 = vpop.f32.mrf.mxu0
        %v1352 = vadd.f32 %v1076, %v1351
        %v1353 = vpop.f32.mrf.mxu0
        %1354 = vmatprep.mubr.f32.mxu0 0.0
        %1355 = vmatmul.mubr.f32.gmra.mxu0 %v1149
        %v1356 = vpop.f32.mrf.mxu0
        %v1357 = vadd.f32 %v1076, %v1356
        %v1358 = vpop.f32.mrf.mxu0
        %1359 = vmatprep.mubr.f32.mxu0 0.0
        %1360 = vmatmul.mubr.f32.gmra.mxu0 %v1152
        %v1361 = vpop.f32.mrf.mxu0
        %v1362 = vadd.f32 %v1076, %v1361
        %v1363 = vpop.f32.mrf.mxu0
        %1364 = vmatprep.mubr.f32.mxu0 0.0
        %1365 = vmatmul.mubr.f32.gmra.mxu0 %v1155
        %v1366 = vpop.f32.mrf.mxu0
        %v1367 = vadd.f32 %v1076, %v1366
        %v1368 = vpop.f32.mrf.mxu0
        %1369 = vmatprep.mubr.f32.mxu0 0.0
        %1370 = vmatmul.mubr.f32.gmra.mxu0 %v1158
        %v1371 = vpop.f32.mrf.mxu0
        %v1372 = vadd.f32 %v1076, %v1371
        %v1373 = vpop.f32.mrf.mxu0
        %1374 = vmatprep.mubr.f32.mxu0 0.0
        %1375 = vmatmul.mubr.f32.gmra.mxu0 %v1161
        %v1376 = vpop.f32.mrf.mxu0
        %v1377 = vadd.f32 %v1076, %v1376
        %v1378 = vpop.f32.mrf.mxu0
        %1379 = vmatprep.mubr.f32.mxu0 0.0
        %1380 = vmatmul.mubr.f32.gmra.mxu0 %v1164
        %v1381 = vpop.f32.mrf.mxu0
        %v1382 = vadd.f32 %v1076, %v1381
        %v1383 = vpop.f32.mrf.mxu0
        %1384 = vmatprep.mubr.f32.mxu0 0.0
        %1385 = vmatmul.mubr.f32.gmra.mxu0 %v1167
        %v1386 = vpop.f32.mrf.mxu0
        %v1387 = vadd.f32 %v1076, %v1386
        %v1388 = vpop.f32.mrf.mxu0
        %1389 = vmatprep.mubr.f32.mxu0 0.0
        %1390 = vmatmul.mubr.f32.gmra.mxu0 %v1170
        %v1391 = vpop.f32.mrf.mxu0
        %v1392 = vadd.f32 %v1076, %v1391
        %v1393 = vpop.f32.mrf.mxu0
        %1394 = vmatprep.mubr.f32.mxu0 0.0
        %1395 = vmatmul.mubr.f32.gmra.mxu0 %v1173
        %v1396 = vpop.f32.mrf.mxu0
        %v1397 = vadd.f32 %v1076, %v1396
        %v1398 = vpop.f32.mrf.mxu0
        %1399 = vdwg.mxu0
        %v1400 = vmax.f32 %v1242, 0.0
        %v1401 = vmax.f32 %v1247, 0.0
        %v1402 = vmax.f32 %v1252, 0.0
        %v1403 = vmax.f32 %v1257, 0.0
        %v1404 = vmax.f32 %v1262, 0.0
        %v1405 = vmax.f32 %v1267, 0.0
        %v1406 = vmax.f32 %v1272, 0.0
        %v1407 = vmax.f32 %v1277, 0.0
        %v1408 = vmax.f32 %v1282, 0.0
        %v1409 = vmax.f32 %v1287, 0.0
        %v1410 = vmax.f32 %v1292, 0.0
        %v1411 = vmax.f32 %v1297, 0.0
        %v1412 = vmax.f32 %v1302, 0.0
        %v1413 = vmax.f32 %v1307, 0.0
        %v1414 = vmax.f32 %v1312, 0.0
        %v1415 = vmax.f32 %v1317, 0.0
        %v1416 = vmax.f32 %v1322, 0.0
        %v1417 = vmax.f32 %v1327, 0.0
        %v1418 = vmax.f32 %v1332, 0.0
        %v1419 = vmax.f32 %v1337, 0.0
        %v1420 = vmax.f32 %v1342, 0.0
        %v1421 = vmax.f32 %v1347, 0.0
        %v1422 = vmax.f32 %v1352, 0.0
        %v1423 = vmax.f32 %v1357, 0.0
        %v1424 = vmax.f32 %v1362, 0.0
        %v1425 = vmax.f32 %v1367, 0.0
        %v1426 = vmax.f32 %v1372, 0.0
        %v1427 = vmax.f32 %v1377, 0.0
        %v1428 = vmax.f32 %v1382, 0.0
        %v1429 = vmax.f32 %v1387, 0.0
        %v1430 = vmax.f32 %v1392, 0.0
        %v1431 = vmax.f32 %v1397, 0.0
        %v1432 = vmin.f32 %v1400, 10.0
        %v1433 = vmin.f32 %v1401, 10.0
        %v1434 = vmin.f32 %v1402, 10.0
        %v1435 = vmin.f32 %v1403, 10.0
        %v1436 = vmin.f32 %v1404, 10.0
        %v1437 = vmin.f32 %v1405, 10.0
        %v1438 = vmin.f32 %v1406, 10.0
        %v1439 = vmin.f32 %v1407, 10.0
        %v1440 = vmin.f32 %v1408, 10.0
        %v1441 = vmin.f32 %v1409, 10.0
        %v1442 = vmin.f32 %v1410, 10.0
        %v1443 = vmin.f32 %v1411, 10.0
        %v1444 = vmin.f32 %v1412, 10.0
        %v1445 = vmin.f32 %v1413, 10.0
        %v1446 = vmin.f32 %v1414, 10.0
        %v1447 = vmin.f32 %v1415, 10.0
        %v1448 = vmin.f32 %v1416, 10.0
        %v1449 = vmin.f32 %v1417, 10.0
        %v1450 = vmin.f32 %v1418, 10.0
        %v1451 = vmin.f32 %v1419, 10.0
        %v1452 = vmin.f32 %v1420, 10.0
        %v1453 = vmin.f32 %v1421, 10.0
        %v1454 = vmin.f32 %v1422, 10.0
        %v1455 = vmin.f32 %v1423, 10.0
        %v1456 = vmin.f32 %v1424, 10.0
        %v1457 = vmin.f32 %v1425, 10.0
        %v1458 = vmin.f32 %v1426, 10.0
        %v1459 = vmin.f32 %v1427, 10.0
        %v1460 = vmin.f32 %v1428, 10.0
        %v1461 = vmin.f32 %v1429, 10.0
        %v1462 = vmin.f32 %v1430, 10.0
        %v1463 = vmin.f32 %v1431, 10.0
        %vm1464 = vcmask 64512
        %1465 = vst.msk [vmem:[%s280] sm:$0xff] %vm1464, %v1432
        %1466 = vst.msk [vmem:[%s280 + $0x8] sm:$0xff] %vm1464, %v1433
        %1467 = vst.msk [vmem:[%s280 + $0x10] sm:$0xff] %vm1464, %v1434
        %1468 = vst.msk [vmem:[%s280 + $0x18] sm:$0xff] %vm1464, %v1435
        %1469 = vst.msk [vmem:[%s280 + $0x20] sm:$0xff] %vm1464, %v1436
        %1470 = vst.msk [vmem:[%s280 + $0x28] sm:$0xff] %vm1464, %v1437
        %1471 = vst.msk [vmem:[%s280 + $0x30] sm:$0xff] %vm1464, %v1438
        %1472 = vst.msk [vmem:[%s280 + $0x38] sm:$0xff] %vm1464, %v1439
        %1473 = vst.msk [vmem:[%s280 + $0x40] sm:$0xff] %vm1464, %v1440
        %1474 = vst.msk [vmem:[%s280 + $0x48] sm:$0xff] %vm1464, %v1441
        %1475 = vst.msk [vmem:[%s280 + $0x50] sm:$0xff] %vm1464, %v1442
        %1476 = vst.msk [vmem:[%s280 + $0x58] sm:$0xff] %vm1464, %v1443
        %1477 = vst.msk [vmem:[%s280 + $0x60] sm:$0xff] %vm1464, %v1444
        %1478 = vst.msk [vmem:[%s280 + $0x68] sm:$0xff] %vm1464, %v1445
        %1479 = vst.msk [vmem:[%s280 + $0x70] sm:$0xff] %vm1464, %v1446
        %1480 = vst.msk [vmem:[%s280 + $0x78] sm:$0xff] %vm1464, %v1447
        %1481 = vst.msk [vmem:[%s280 + $0x80] sm:$0xff] %vm1464, %v1448
        %1482 = vst.msk [vmem:[%s280 + $0x88] sm:$0xff] %vm1464, %v1449
        %1483 = vst.msk [vmem:[%s280 + $0x90] sm:$0xff] %vm1464, %v1450
        %1484 = vst.msk [vmem:[%s280 + $0x98] sm:$0xff] %vm1464, %v1451
        %1485 = vst.msk [vmem:[%s280 + $0xa0] sm:$0xff] %vm1464, %v1452
        %1486 = vst.msk [vmem:[%s280 + $0xa8] sm:$0xff] %vm1464, %v1453
        %1487 = vst.msk [vmem:[%s280 + $0xb0] sm:$0xff] %vm1464, %v1454
        %1488 = vst.msk [vmem:[%s280 + $0xb8] sm:$0xff] %vm1464, %v1455
        %1489 = vst.msk [vmem:[%s280 + $0xc0] sm:$0xff] %vm1464, %v1456
        %1490 = vst.msk [vmem:[%s280 + $0xc8] sm:$0xff] %vm1464, %v1457
        %1491 = vst.msk [vmem:[%s280 + $0xd0] sm:$0xff] %vm1464, %v1458
        %1492 = vst.msk [vmem:[%s280 + $0xd8] sm:$0xff] %vm1464, %v1459
        %1493 = vst.msk [vmem:[%s280 + $0xe0] sm:$0xff] %vm1464, %v1460
        %1494 = vst.msk [vmem:[%s280 + $0xe8] sm:$0xff] %vm1464, %v1461
        %1495 = vst.msk [vmem:[%s280 + $0xf0] sm:$0xff] %vm1464, %v1462
        %1496 = vst.msk [vmem:[%s280 + $0xf8] sm:$0xff] %vm1464, %v1463
        %s1497 = sand.u32 %s178, 1
        %s1498 = sand.u32 %s178, 1
        %s1499 = smul.addr %s1498, 256
        %s1500 = scalar_lea.vmem [#allocation2], %s1499
        // Predicated region
        $region49: #{tpu_custom_call.1} parent=47 // pred_check
          %p1501 = pneg %p188
        $region50: #{tpu_custom_call.1} parent=47 // pred_check_branch
          %1503 = sbr.rel (%p1501) target = $region52
        $region51: #{tpu_custom_call.1} parent=47 // pred_region
          %s1504 = smul.u32 32, %s18
          %s1505 = ssub.s32 38, %s1504
          %p1506 = scmp.lt.s32.totalorder %s1505, 32
          %s1507 = scalar_select %p1506, %s1505, 32
          %s1508 = smul.u32 128, %s1507
          %p1509 = scmp.ne.s32.totalorder 0, %s1508
          %s1510 = smul.addr %s1504, 8
          %s1511 = scalar_lea.vmem %s7, %s1510
          // Predicated region
          $region53: #{tpu_custom_call.1} parent=51 // pred_check
            %p1512 = pneg %p1509
          $region54: #{tpu_custom_call.1} parent=51 // pred_check_branch
            %1514 = sbr.rel (%p1512) target = $region56
          $region55: #{tpu_custom_call.1} parent=51 // pred_region
            // Predicated region
            $region57: #{tpu_custom_call.1} parent=55 // pred_check
              _
            $region58: #{tpu_custom_call.1} parent=55 // pred_check_branch
              %1516 = sbr.rel (0) target = $region60
            $region59: #{tpu_custom_call.1} parent=55 // pred_region
              // Predicated region
              $region79: #{tpu_custom_call.1} parent=59 // pred_check
                _
              $region80: #{tpu_custom_call.1} parent=59 // pred_check_branch
                %1628 = sbr.rel (0) target = $region82
              $region81: #{tpu_custom_call.1} parent=59 // pred_region
                %s1629 = sshrl.u32 %s1507, 5
                // While loop
                $region83: #{tpu_custom_call.1} parent=81 // loop_pre_header
                  _
                $region84: #{tpu_custom_call.1} parent=81 // loop_header
                  %s1631 = sphi 0, %s1633
                  %p1632 = scmp.ge.s32.totalorder %s1631, %s1629
                  %s1636 = sphi 0, %s1705
                  %s1637 = sphi %s1500, %s1708
                  %s1638 = sphi %s1511, %s1709
                $region85: #{tpu_custom_call.1} parent=81 // loop_header_branch
                  %1635 = sbr.rel (%p1632) target = $region89
                $region86: #{tpu_custom_call.1} parent=81 // loop_body
                  %v1639 = vld [vmem:[%s1637] sm:$0xff]
                  %1640 = vst [vmem:[%s1638] sm:$0xff] %v1639
                  %v1641 = vld [vmem:[%s1637 + $0x8] sm:$0xff]
                  %1642 = vst [vmem:[%s1638 + $0x8] sm:$0xff] %v1641
                  %v1643 = vld [vmem:[%s1637 + $0x10] sm:$0xff]
                  %1644 = vst [vmem:[%s1638 + $0x10] sm:$0xff] %v1643
                  %v1645 = vld [vmem:[%s1637 + $0x18] sm:$0xff]
                  %1646 = vst [vmem:[%s1638 + $0x18] sm:$0xff] %v1645
                  %v1647 = vld [vmem:[%s1637 + $0x20] sm:$0xff]
                  %1648 = vst [vmem:[%s1638 + $0x20] sm:$0xff] %v1647
                  %v1649 = vld [vmem:[%s1637 + $0x28] sm:$0xff]
                  %1650 = vst [vmem:[%s1638 + $0x28] sm:$0xff] %v1649
                  %v1651 = vld [vmem:[%s1637 + $0x30] sm:$0xff]
                  %1652 = vst [vmem:[%s1638 + $0x30] sm:$0xff] %v1651
                  %v1653 = vld [vmem:[%s1637 + $0x38] sm:$0xff]
                  %1654 = vst [vmem:[%s1638 + $0x38] sm:$0xff] %v1653
                  %v1655 = vld [vmem:[%s1637 + $0x40] sm:$0xff]
                  %1656 = vst [vmem:[%s1638 + $0x40] sm:$0xff] %v1655
                  %v1657 = vld [vmem:[%s1637 + $0x48] sm:$0xff]
                  %1658 = vst [vmem:[%s1638 + $0x48] sm:$0xff] %v1657
                  %v1659 = vld [vmem:[%s1637 + $0x50] sm:$0xff]
                  %1660 = vst [vmem:[%s1638 + $0x50] sm:$0xff] %v1659
                  %v1661 = vld [vmem:[%s1637 + $0x58] sm:$0xff]
                  %1662 = vst [vmem:[%s1638 + $0x58] sm:$0xff] %v1661
                  %v1663 = vld [vmem:[%s1637 + $0x60] sm:$0xff]
                  %1664 = vst [vmem:[%s1638 + $0x60] sm:$0xff] %v1663
                  %v1665 = vld [vmem:[%s1637 + $0x68] sm:$0xff]
                  %1666 = vst [vmem:[%s1638 + $0x68] sm:$0xff] %v1665
                  %v1667 = vld [vmem:[%s1637 + $0x70] sm:$0xff]
                  %1668 = vst [vmem:[%s1638 + $0x70] sm:$0xff] %v1667
                  %v1669 = vld [vmem:[%s1637 + $0x78] sm:$0xff]
                  %1670 = vst [vmem:[%s1638 + $0x78] sm:$0xff] %v1669
                  %v1671 = vld [vmem:[%s1637 + $0x80] sm:$0xff]
                  %1672 = vst [vmem:[%s1638 + $0x80] sm:$0xff] %v1671
                  %v1673 = vld [vmem:[%s1637 + $0x88] sm:$0xff]
                  %1674 = vst [vmem:[%s1638 + $0x88] sm:$0xff] %v1673
                  %v1675 = vld [vmem:[%s1637 + $0x90] sm:$0xff]
                  %1676 = vst [vmem:[%s1638 + $0x90] sm:$0xff] %v1675
                  %v1677 = vld [vmem:[%s1637 + $0x98] sm:$0xff]
                  %1678 = vst [vmem:[%s1638 + $0x98] sm:$0xff] %v1677
                  %v1679 = vld [vmem:[%s1637 + $0xa0] sm:$0xff]
                  %1680 = vst [vmem:[%s1638 + $0xa0] sm:$0xff] %v1679
                  %v1681 = vld [vmem:[%s1637 + $0xa8] sm:$0xff]
                  %1682 = vst [vmem:[%s1638 + $0xa8] sm:$0xff] %v1681
                  %v1683 = vld [vmem:[%s1637 + $0xb0] sm:$0xff]
                  %1684 = vst [vmem:[%s1638 + $0xb0] sm:$0xff] %v1683
                  %v1685 = vld [vmem:[%s1637 + $0xb8] sm:$0xff]
                  %1686 = vst [vmem:[%s1638 + $0xb8] sm:$0xff] %v1685
                  %v1687 = vld [vmem:[%s1637 + $0xc0] sm:$0xff]
                  %1688 = vst [vmem:[%s1638 + $0xc0] sm:$0xff] %v1687
                  %v1689 = vld [vmem:[%s1637 + $0xc8] sm:$0xff]
                  %1690 = vst [vmem:[%s1638 + $0xc8] sm:$0xff] %v1689
                  %v1691 = vld [vmem:[%s1637 + $0xd0] sm:$0xff]
                  %1692 = vst [vmem:[%s1638 + $0xd0] sm:$0xff] %v1691
                  %v1693 = vld [vmem:[%s1637 + $0xd8] sm:$0xff]
                  %1694 = vst [vmem:[%s1638 + $0xd8] sm:$0xff] %v1693
                  %v1695 = vld [vmem:[%s1637 + $0xe0] sm:$0xff]
                  %1696 = vst [vmem:[%s1638 + $0xe0] sm:$0xff] %v1695
                  %v1697 = vld [vmem:[%s1637 + $0xe8] sm:$0xff]
                  %1698 = vst [vmem:[%s1638 + $0xe8] sm:$0xff] %v1697
                  %v1699 = vld [vmem:[%s1637 + $0xf0] sm:$0xff]
                  %1700 = vst [vmem:[%s1638 + $0xf0] sm:$0xff] %v1699
                  %v1701 = vld [vmem:[%s1637 + $0xf8] sm:$0xff]
                  %1702 = vst [vmem:[%s1638 + $0xf8] sm:$0xff] %v1701
                  %s1703 = sadd.s32 1, %s1636
                  %p1704 = scmp.ge.s32.totalorder %s1703, %s1629
                  %s1705 = scalar_select %p1704, 0, %s1703
                  %s1706 = smul.u32 %s1705, 256
                  %s1707 = smul.u32 %s1705, 256
                  %s1708 = scalar_lea.vmem %s1500, %s1706 [#allocation2]
                  %s1709 = scalar_lea.vmem %s1511, %s1707
                $region87: #{tpu_custom_call.1} parent=81 // loop_footer
                  %s1633 = sadd.s32 %s1631, 1
                $region88: #{tpu_custom_call.1} parent=81 // loop_footer_branch
                  %1630 = sbr.rel target = $region84
                $region89: #{tpu_custom_call.1} parent=81 // loop_exit
                  _
                %s1710 = sshrl.u32 %s1507, 5
                %s1711 = sand.u32 %s1507, 31
                %s1712 = smul.u32 %s1710, 32
                %s1713 = smul.u32 8, %s1712
                %s1714 = scalar_lea.vmem %s1500, %s1713 [#allocation2]
                %s1715 = smul.u32 8, %s1712
                %s1716 = scalar_lea.vmem %s1511, %s1715
                // While loop
                $region90: #{tpu_custom_call.1} parent=81 // loop_pre_header
                  _
                $region91: #{tpu_custom_call.1} parent=81 // loop_header
                  %s1718 = sphi 0, %s1720
                  %p1719 = scmp.ge.s32.totalorder %s1718, %s1711
                  %s1723 = sphi 0, %s1730
                  %s1724 = sphi %s1714, %s1733
                  %s1725 = sphi %s1716, %s1734
                $region92: #{tpu_custom_call.1} parent=81 // loop_header_branch
                  %1722 = sbr.rel (%p1719) target = $region96
                $region93: #{tpu_custom_call.1} parent=81 // loop_body
                  %v1726 = vld [vmem:[%s1724] sm:$0xff]
                  %1727 = vst [vmem:[%s1725] sm:$0xff] %v1726
                  %s1728 = sadd.s32 1, %s1723
                  %p1729 = scmp.ge.s32.totalorder %s1728, %s1711
                  %s1730 = scalar_select %p1729, 0, %s1728
                  %s1731 = smul.u32 %s1730, 8
                  %s1732 = smul.u32 %s1730, 8
                  %s1733 = scalar_lea.vmem %s1714, %s1731 [#allocation2]
                  %s1734 = scalar_lea.vmem %s1716, %s1732
                $region94: #{tpu_custom_call.1} parent=81 // loop_footer
                  %s1720 = sadd.s32 %s1718, 1
                $region95: #{tpu_custom_call.1} parent=81 // loop_footer_branch
                  %1717 = sbr.rel target = $region91
                $region96: #{tpu_custom_call.1} parent=81 // loop_exit
                  _
              $region82: #{tpu_custom_call.1} parent=59 // pred_fallthru
                _
              // Predicated region
              $region97: #{tpu_custom_call.1} parent=59 // pred_check
                _
              $region98: #{tpu_custom_call.1} parent=59 // pred_check_branch
                %1736 = sbr.rel target = $region100
              $region99: #{tpu_custom_call.1} parent=59 // pred_region
                _
              $region100: #{tpu_custom_call.1} parent=59 // pred_fallthru
                _
            $region60: #{tpu_custom_call.1} parent=55 // pred_fallthru
              _
            // Predicated region
            $region61: #{tpu_custom_call.1} parent=55 // pred_check
              _
            $region62: #{tpu_custom_call.1} parent=55 // pred_check_branch
              %1518 = sbr.rel target = $region64
            $region63: #{tpu_custom_call.1} parent=55 // pred_region
              %s1520 = ssub.s32 256, 1
              %s1521 = sshrl.u32 %s1507, 5
              // While loop
              $region65: #{tpu_custom_call.1} parent=63 // loop_pre_header
                _
              $region66: #{tpu_custom_call.1} parent=63 // loop_header
                %s1523 = sphi 0, %s1525
                %p1524 = scmp.ge.s32.totalorder %s1523, %s1521
                %s1528 = sphi 0, %s1597
                %s1529 = sphi %s1500, %s1600
                %s1530 = sphi %s1511, %s1601
              $region67: #{tpu_custom_call.1} parent=63 // loop_header_branch
                %1527 = sbr.rel (%p1524) target = $region71
              $region68: #{tpu_custom_call.1} parent=63 // loop_body
                %v1531 = vld [vmem:[%s1529] sm:%s1520]
                %1532 = vst [vmem:[%s1530] sm:%s1520] %v1531
                %v1533 = vld [vmem:[%s1529 + $0x8] sm:%s1520]
                %1534 = vst [vmem:[%s1530 + $0x8] sm:%s1520] %v1533
                %v1535 = vld [vmem:[%s1529 + $0x10] sm:%s1520]
                %1536 = vst [vmem:[%s1530 + $0x10] sm:%s1520] %v1535
                %v1537 = vld [vmem:[%s1529 + $0x18] sm:%s1520]
                %1538 = vst [vmem:[%s1530 + $0x18] sm:%s1520] %v1537
                %v1539 = vld [vmem:[%s1529 + $0x20] sm:%s1520]
                %1540 = vst [vmem:[%s1530 + $0x20] sm:%s1520] %v1539
                %v1541 = vld [vmem:[%s1529 + $0x28] sm:%s1520]
                %1542 = vst [vmem:[%s1530 + $0x28] sm:%s1520] %v1541
                %v1543 = vld [vmem:[%s1529 + $0x30] sm:%s1520]
                %1544 = vst [vmem:[%s1530 + $0x30] sm:%s1520] %v1543
                %v1545 = vld [vmem:[%s1529 + $0x38] sm:%s1520]
                %1546 = vst [vmem:[%s1530 + $0x38] sm:%s1520] %v1545
                %v1547 = vld [vmem:[%s1529 + $0x40] sm:%s1520]
                %1548 = vst [vmem:[%s1530 + $0x40] sm:%s1520] %v1547
                %v1549 = vld [vmem:[%s1529 + $0x48] sm:%s1520]
                %1550 = vst [vmem:[%s1530 + $0x48] sm:%s1520] %v1549
                %v1551 = vld [vmem:[%s1529 + $0x50] sm:%s1520]
                %1552 = vst [vmem:[%s1530 + $0x50] sm:%s1520] %v1551
                %v1553 = vld [vmem:[%s1529 + $0x58] sm:%s1520]
                %1554 = vst [vmem:[%s1530 + $0x58] sm:%s1520] %v1553
                %v1555 = vld [vmem:[%s1529 + $0x60] sm:%s1520]
                %1556 = vst [vmem:[%s1530 + $0x60] sm:%s1520] %v1555
                %v1557 = vld [vmem:[%s1529 + $0x68] sm:%s1520]
                %1558 = vst [vmem:[%s1530 + $0x68] sm:%s1520] %v1557
                %v1559 = vld [vmem:[%s1529 + $0x70] sm:%s1520]
                %1560 = vst [vmem:[%s1530 + $0x70] sm:%s1520] %v1559
                %v1561 = vld [vmem:[%s1529 + $0x78] sm:%s1520]
                %1562 = vst [vmem:[%s1530 + $0x78] sm:%s1520] %v1561
                %v1563 = vld [vmem:[%s1529 + $0x80] sm:%s1520]
                %1564 = vst [vmem:[%s1530 + $0x80] sm:%s1520] %v1563
                %v1565 = vld [vmem:[%s1529 + $0x88] sm:%s1520]
                %1566 = vst [vmem:[%s1530 + $0x88] sm:%s1520] %v1565
                %v1567 = vld [vmem:[%s1529 + $0x90] sm:%s1520]
                %1568 = vst [vmem:[%s1530 + $0x90] sm:%s1520] %v1567
                %v1569 = vld [vmem:[%s1529 + $0x98] sm:%s1520]
                %1570 = vst [vmem:[%s1530 + $0x98] sm:%s1520] %v1569
                %v1571 = vld [vmem:[%s1529 + $0xa0] sm:%s1520]
                %1572 = vst [vmem:[%s1530 + $0xa0] sm:%s1520] %v1571
                %v1573 = vld [vmem:[%s1529 + $0xa8] sm:%s1520]
                %1574 = vst [vmem:[%s1530 + $0xa8] sm:%s1520] %v1573
                %v1575 = vld [vmem:[%s1529 + $0xb0] sm:%s1520]
                %1576 = vst [vmem:[%s1530 + $0xb0] sm:%s1520] %v1575
                %v1577 = vld [vmem:[%s1529 + $0xb8] sm:%s1520]
                %1578 = vst [vmem:[%s1530 + $0xb8] sm:%s1520] %v1577
                %v1579 = vld [vmem:[%s1529 + $0xc0] sm:%s1520]
                %1580 = vst [vmem:[%s1530 + $0xc0] sm:%s1520] %v1579
                %v1581 = vld [vmem:[%s1529 + $0xc8] sm:%s1520]
                %1582 = vst [vmem:[%s1530 + $0xc8] sm:%s1520] %v1581
                %v1583 = vld [vmem:[%s1529 + $0xd0] sm:%s1520]
                %1584 = vst [vmem:[%s1530 + $0xd0] sm:%s1520] %v1583
                %v1585 = vld [vmem:[%s1529 + $0xd8] sm:%s1520]
                %1586 = vst [vmem:[%s1530 + $0xd8] sm:%s1520] %v1585
                %v1587 = vld [vmem:[%s1529 + $0xe0] sm:%s1520]
                %1588 = vst [vmem:[%s1530 + $0xe0] sm:%s1520] %v1587
                %v1589 = vld [vmem:[%s1529 + $0xe8] sm:%s1520]
                %1590 = vst [vmem:[%s1530 + $0xe8] sm:%s1520] %v1589
                %v1591 = vld [vmem:[%s1529 + $0xf0] sm:%s1520]
                %1592 = vst [vmem:[%s1530 + $0xf0] sm:%s1520] %v1591
                %v1593 = vld [vmem:[%s1529 + $0xf8] sm:%s1520]
                %1594 = vst [vmem:[%s1530 + $0xf8] sm:%s1520] %v1593
                %s1595 = sadd.s32 1, %s1528
                %p1596 = scmp.ge.s32.totalorder %s1595, %s1521
                %s1597 = scalar_select %p1596, 0, %s1595
                %s1598 = smul.u32 %s1597, 256
                %s1599 = smul.u32 %s1597, 256
                %s1600 = scalar_lea.vmem %s1500, %s1598 [#allocation2]
                %s1601 = scalar_lea.vmem %s1511, %s1599
              $region69: #{tpu_custom_call.1} parent=63 // loop_footer
                %s1525 = sadd.s32 %s1523, 1
              $region70: #{tpu_custom_call.1} parent=63 // loop_footer_branch
                %1522 = sbr.rel target = $region66
              $region71: #{tpu_custom_call.1} parent=63 // loop_exit
                _
              %s1602 = sshrl.u32 %s1507, 5
              %s1603 = sand.u32 %s1507, 31
              %s1604 = smul.u32 %s1602, 32
              %s1605 = smul.u32 8, %s1604
              %s1606 = scalar_lea.vmem %s1500, %s1605 [#allocation2]
              %s1607 = smul.u32 8, %s1604
              %s1608 = scalar_lea.vmem %s1511, %s1607
              // While loop
              $region72: #{tpu_custom_call.1} parent=63 // loop_pre_header
                _
              $region73: #{tpu_custom_call.1} parent=63 // loop_header
                %s1610 = sphi 0, %s1612
                %p1611 = scmp.ge.s32.totalorder %s1610, %s1603
                %s1615 = sphi 0, %s1622
                %s1616 = sphi %s1606, %s1625
                %s1617 = sphi %s1608, %s1626
              $region74: #{tpu_custom_call.1} parent=63 // loop_header_branch
                %1614 = sbr.rel (%p1611) target = $region78
              $region75: #{tpu_custom_call.1} parent=63 // loop_body
                %v1618 = vld [vmem:[%s1616] sm:%s1520]
                %1619 = vst [vmem:[%s1617] sm:%s1520] %v1618
                %s1620 = sadd.s32 1, %s1615
                %p1621 = scmp.ge.s32.totalorder %s1620, %s1603
                %s1622 = scalar_select %p1621, 0, %s1620
                %s1623 = smul.u32 %s1622, 8
                %s1624 = smul.u32 %s1622, 8
                %s1625 = scalar_lea.vmem %s1606, %s1623 [#allocation2]
                %s1626 = scalar_lea.vmem %s1608, %s1624
              $region76: #{tpu_custom_call.1} parent=63 // loop_footer
                %s1612 = sadd.s32 %s1610, 1
              $region77: #{tpu_custom_call.1} parent=63 // loop_footer_branch
                %1609 = sbr.rel target = $region73
              $region78: #{tpu_custom_call.1} parent=63 // loop_exit
                _
            $region64: #{tpu_custom_call.1} parent=55 // pred_fallthru
              _
          $region56: #{tpu_custom_call.1} parent=51 // pred_fallthru
            _
          %1737 = vnop
        $region52: #{tpu_custom_call.1} parent=47 // pred_fallthru
          _
      $region48: #{tpu_custom_call.1} parent=5 // pred_fallthru
        _
      %p1738 = scmp.le.s32.totalorder 2, %s13
      // Predicated region
      $region101: #{tpu_custom_call.1} parent=5 // pred_check
        %p1739 = pneg %p1738
      $region102: #{tpu_custom_call.1} parent=5 // pred_check_branch
        %1741 = sbr.rel (%p1739) target = $region104
      $region103: #{tpu_custom_call.1} parent=5 // pred_region
        %s1742 = ssub.s32 %s13, 2
        // Predicated region
        $region105: #{tpu_custom_call.1} parent=103 // pred_check
          %p1743 = pneg %p194
        $region106: #{tpu_custom_call.1} parent=103 // pred_check_branch
          %1745 = sbr.rel (%p1743) target = $region108
        $region107: #{tpu_custom_call.1} parent=103 // pred_region
          %s1746 = sand.u32 %s179, 1
          %s1747 = sand.u32 %s179, 1
          %s1748 = smul.addr %s1747, 256
          %s1749 = scalar_lea.vmem [#allocation2], %s1748
        $region108: #{tpu_custom_call.1} parent=103 // pred_fallthru
          _
      $region104: #{tpu_custom_call.1} parent=5 // pred_fallthru
        _
    $region6: #{tpu_custom_call.1} parent=1 // loop_footer
      %s17 = sadd.s32 1, %s13
    $region7: #{tpu_custom_call.1} parent=1 // loop_footer_branch
      %12 = sbr.rel target = $region3
    $region8: #{tpu_custom_call.1} parent=1 // loop_exit
      _

</llo_original>
